<compile_context>
chip_gen: v7x
topology: tpu7x:2x2x1
jax: 0.10.0
libtpu: 0.0.40
codegen_flags: <defaults>
</compile_context>

<pallas_src>
import functools

import jax
import jax.numpy as jnp
from jax import lax
from jax.experimental import pallas as pl
from jax.experimental.pallas import tpu as pltpu


def _round_up(x, m):
    return (x + m - 1) // m * m


def _output_block_kernel(block_start_ref, nblocks_ref,            # scalar prefetch (SMEM)
                         dst_ref, rbf_ref, m_ref, gid_ref,        # tiled inputs
                         w_rbf_ref, w_lay_ref, b_lay_ref, w_fin_ref,  # resident weights
                         out_ref,                                 # (G, T_pad) output
                         node_acc, out_acc,                       # VMEM scratch
                         *, num_dense, activation, tile_n, num_graphs):
    i = pl.program_id(0)            # node tile
    k = pl.program_id(1)            # edge chunk (relative to this tile's range)
    k_last = pl.num_programs(1) - 1

    @pl.when(jnp.logical_and(i == 0, k == 0))
    def _():
        out_acc[...] = jnp.zeros_like(out_acc)

    @pl.when(k == 0)
    def _():
        node_acc[...] = jnp.zeros_like(node_acc)

    # ---- edge phase: tmp = m * (rbf @ W_rbf), scatter-add into this node tile ----
    # Chunks beyond this tile's edge range are skipped (their DMA index is
    # clamped to the previous block, so the copy is elided too).
    @pl.when(k < nblocks_ref[i])
    def _():
        rbf_proj = jnp.dot(rbf_ref[...], w_rbf_ref[...],
                           preferred_element_type=jnp.float32)           # (TE, D)
        tmp = m_ref[...].astype(jnp.float32) * rbf_proj                   # (TE, D)
        te = dst_ref.shape[1]
        local = dst_ref[...] - i * tile_n                                 # (1, TE)
        # On-the-fly scatter one-hot; edges whose dst is outside this node
        # tile (boundary chunks, padding) produce all-zero columns.
        onehot = (lax.broadcasted_iota(jnp.int32, (tile_n, te), 0)
                  == local).astype(jnp.bfloat16)                          # (TN, TE)
        node_acc[...] += jnp.dot(onehot, tmp.astype(jnp.bfloat16),
                                 preferred_element_type=jnp.float32)

    # ---- node phase: dense stack, final projection, per-graph sum readout ----
    @pl.when(k == k_last)
    def _():
        t = node_acc[...]                                                 # (TN, D) f32
        for l in range(num_dense):                # static unroll; one weight tile live
            h = jnp.dot(t.astype(jnp.bfloat16), w_lay_ref[l],
                        preferred_element_type=jnp.float32)
            h = h + b_lay_ref[l:l + 1, :]                                 # f32 bias
            if activation is not None:
                h = activation(h)
            t = h
        t = jnp.dot(t.astype(jnp.bfloat16), w_fin_ref[...],
                    preferred_element_type=jnp.float32)                   # (TN, T_pad)
        gid = gid_ref[...]                                                # (1, TN)
        tn = gid.shape[1]
        # Per-graph readout one-hot; padded nodes carry gid = -1 -> excluded.
        gsel = (lax.broadcasted_iota(jnp.int32, (num_graphs, tn), 0)
                == gid).astype(jnp.bfloat16)                              # (G, TN)
        out_acc[...] += jnp.dot(gsel, t.astype(jnp.bfloat16),
                                preferred_element_type=jnp.float32)
        out_ref[...] = out_acc[...]


def output_block_forward(rbf, m, edge_dst, node_graph_id, num_graphs, params,
                         activation=None, *, tile_n=128, tile_e=256):
    """OutputBlock forward pass as one Pallas TPU kernel.

    rbf:           (E, num_radial)  float32
    m:             (E, emb_size)    float32
    edge_dst:      (E,)   int32     destination node of each edge
    node_graph_id: (N,)   int32     graph membership of each node
    returns:       (num_graphs, num_targets) float32
    """
    E, R = rbf.shape
    D = m.shape[1]
    N = node_graph_id.shape[0]
    T = params["w_final"].shape[1]
    L = params["w_layers"].shape[0]

    d_pad = _round_up(max(D, 128), 128)
    t_pad = _round_up(max(T, 128), 128)
    n_pad = _round_up(N, tile_n)
    e_pad = _round_up(max(E, tile_e), tile_e)
    num_node_tiles = n_pad // tile_n

    # ---------------- structure glue (sort + pad), no heavy compute ----------------
    order = jnp.argsort(edge_dst)
    dst_s = edge_dst[order].astype(jnp.int32)
    rbf_s = rbf[order]
    m_s = m[order]

    dst_p = jnp.full((e_pad,), n_pad, jnp.int32).at[:E].set(dst_s)
    rbf_p = jnp.zeros((e_pad, R), jnp.bfloat16).at[:E, :].set(rbf_s.astype(jnp.bfloat16))
    m_p = jnp.zeros((e_pad, d_pad), jnp.bfloat16).at[:E, :D].set(m_s.astype(jnp.bfloat16))
    gid_p = jnp.full((n_pad,), -1, jnp.int32).at[:N].set(node_graph_id.astype(jnp.int32))

    dst_2d = dst_p.reshape(1, e_pad)
    gid_2d = gid_p.reshape(1, n_pad)

    # Zero-padded, bf16 weights (padding never leaks: padded rows/cols are 0).
    w_rbf = jnp.zeros((R, d_pad), jnp.bfloat16).at[:, :D].set(
        params["w_rbf"].astype(jnp.bfloat16))
    w_lay = jnp.zeros((L, d_pad, d_pad), jnp.bfloat16).at[:, :D, :D].set(
        params["w_layers"].astype(jnp.bfloat16))
    b_lay = jnp.zeros((L, d_pad), jnp.float32).at[:, :D].set(params["b_layers"])
    w_fin = jnp.zeros((d_pad, t_pad), jnp.bfloat16).at[:D, :T].set(
        params["w_final"].astype(jnp.bfloat16))

    # Per-node-tile edge-chunk metadata for scalar prefetch.  Like MoE group
    # sizes this is host-visible metadata, so the max chunk count (grid extent)
    # is pulled to the host here.
    # TODO(synk): for a fully jittable path, use a static upper bound on the
    # per-tile edge-chunk count instead of int(max(...)).
    bounds = jnp.arange(num_node_tiles + 1, dtype=jnp.int32) * tile_n
    pos = jnp.searchsorted(dst_p, bounds).astype(jnp.int32)
    starts, ends = pos[:-1], pos[1:]
    has_edges = ends > starts
    block_start = jnp.where(has_edges, starts // tile_e, 0).astype(jnp.int32)
    nblocks = jnp.where(has_edges,
                        (ends - 1) // tile_e - starts // tile_e + 1,
                        0).astype(jnp.int32)
    kmax = max(int(jnp.max(nblocks)), 1)

    def edge_idx(i, k, bs, nb):
        # Clamp chunks past this tile's range to the previous block so the
        # pipeline skips the redundant DMA (block index unchanged).
        kk = jnp.minimum(k, jnp.maximum(nb[i] - 1, 0))
        return bs[i] + kk

    kernel = functools.partial(_output_block_kernel,
                               num_dense=L, activation=activation,
                               tile_n=tile_n, num_graphs=num_graphs)

    grid_spec = pltpu.PrefetchScalarGridSpec(
        num_scalar_prefetch=2,
        grid=(num_node_tiles, kmax),
        in_specs=[
            pl.BlockSpec((1, tile_e),
                         lambda i, k, bs, nb: (0, edge_idx(i, k, bs, nb))),      # dst
            pl.BlockSpec((tile_e, R),
                         lambda i, k, bs, nb: (edge_idx(i, k, bs, nb), 0)),      # rbf
            pl.BlockSpec((tile_e, d_pad),
                         lambda i, k, bs, nb: (edge_idx(i, k, bs, nb), 0)),      # m
            pl.BlockSpec((1, tile_n), lambda i, k, bs, nb: (0, i)),              # gid
            pl.BlockSpec((R, d_pad), lambda i, k, bs, nb: (0, 0)),               # w_rbf
            pl.BlockSpec((L, d_pad, d_pad), lambda i, k, bs, nb: (0, 0, 0)),     # w_layers
            pl.BlockSpec((L, d_pad), lambda i, k, bs, nb: (0, 0)),               # b_layers
            pl.BlockSpec((d_pad, t_pad), lambda i, k, bs, nb: (0, 0)),           # w_final
        ],
        out_specs=pl.BlockSpec((num_graphs, t_pad), lambda i, k, bs, nb: (0, 0)),
        scratch_shapes=[pltpu.VMEM((tile_n, d_pad), jnp.float32),   # node accumulator
                        pltpu.VMEM((num_graphs, t_pad), jnp.float32)],  # readout acc
    )

    out = pl.pallas_call(
        kernel,
        grid_spec=grid_spec,
        out_shape=jax.ShapeDtypeStruct((num_graphs, t_pad), jnp.float32),
        compiler_params=pltpu.CompilerParams(
            # Both axes accumulate into shared scratch/output -> "arbitrary".
            dimension_semantics=("arbitrary", "arbitrary"),
            vmem_limit_bytes=32 * 1024 * 1024,
        ),
    )(block_start, nblocks, dst_2d, rbf_p, m_p, gid_2d, w_rbf, w_lay, b_lay, w_fin)

    return out[:, :T]


def init_params(key, emb_size, num_radial, num_dense, num_targets):
    """Deterministic parameter init (shapes match the PyTorch module).

    PyTorch nn.Linear stores weight as (out, in); we keep the (in, out)
    transpose so the kernel right-multiplies.  GlorotOrthogonal is
    approximated with glorot-uniform (init choice does not affect forward
    semantics); dense_final uses uniform [0, 1) like nn.init.uniform_.
    """
    k_rbf, k_lay, k_b, k_fin = jax.random.split(key, 4)
    glorot = jax.nn.initializers.glorot_uniform()
    w_rbf = glorot(k_rbf, (num_radial, emb_size), jnp.float32)
    w_layers = glorot(k_lay, (num_dense, emb_size, emb_size), jnp.float32)
    bound = 1.0 / jnp.sqrt(emb_size)
    b_layers = jax.random.uniform(k_b, (num_dense, emb_size), jnp.float32,
                                  -bound, bound)
    w_final = jax.random.uniform(k_fin, (emb_size, num_targets), jnp.float32,
                                 0.0, 1.0)
    return {"w_rbf": w_rbf, "w_layers": w_layers, "b_layers": b_layers,
            "w_final": w_final}


def _reference(rbf, m, edge_dst, node_graph_id, num_graphs, params, activation):
    """Pure-JAX f32 reference (segment sums) for a correctness check."""
    num_nodes = node_graph_id.shape[0]
    tmp = m * (rbf @ params["w_rbf"])
    t = jax.ops.segment_sum(tmp, edge_dst, num_segments=num_nodes)
    for l in range(params["w_layers"].shape[0]):
        t = t @ params["w_layers"][l] + params["b_layers"][l]
        if activation is not None:
            t = activation(t)
    t = t @ params["w_final"]
    return jax.ops.segment_sum(t, node_graph_id, num_segments=num_graphs)


if __name__ == "__main__":
    emb_size = 32
    num_radial = 8
    num_dense = 2
    num_targets = 4
    num_nodes = 16
    num_edges = 48
    num_graphs = 2
    activation = jax.nn.swish

    key = jax.random.PRNGKey(0)
    k_p, k_rbf, k_m, k_dst = jax.random.split(key, 4)

    params = init_params(k_p, emb_size, num_radial, num_dense, num_targets)

    rbf = jax.random.normal(k_rbf, (num_edges, num_radial), jnp.float32)
    m = jax.random.normal(k_m, (num_edges, emb_size), jnp.float32)
    edge_dst = jax.random.randint(k_dst, (num_edges,), 0, num_nodes,
                                  dtype=jnp.int32)
    # First half of nodes belong to graph 0, second half to graph 1.
    node_graph_id = (jnp.arange(num_nodes, dtype=jnp.int32) >=
                     (num_nodes // 2)).astype(jnp.int32)

    out = output_block_forward(rbf, m, edge_dst, node_graph_id, num_graphs,
                               params, activation=activation)
    out = jax.block_until_ready(out)

    ref = _reference(rbf, m, edge_dst, node_graph_id, num_graphs, params,
                     activation)
    assert out.shape == (num_graphs, num_targets)
    # bf16 matmul operands with f32 accumulation -> relaxed tolerance vs f32 ref.
    assert jnp.allclose(out, ref, rtol=5e-2, atol=5e-2), (out, ref)
    print("KERNEL_OK")
</pallas_src>

<mosaic_0001>
module attributes {stable_mosaic.version = 11 : i64} {
  func.func @_output_block_kernel(%arg0: i32, %arg1: i32, %arg2: memref<1xi32, #tpu.memory_space<smem>>, %arg3: memref<1xi32, #tpu.memory_space<smem>>, %arg4: memref<1x256xi32, #tpu.memory_space<vmem>>, %arg5: memref<256x8xbf16, #tpu.memory_space<vmem>>, %arg6: memref<256x128xbf16, #tpu.memory_space<vmem>>, %arg7: memref<1x128xi32, #tpu.memory_space<vmem>>, %arg8: memref<8x128xbf16, #tpu.memory_space<vmem>>, %arg9: memref<2x128x128xbf16, #tpu.memory_space<vmem>>, %arg10: memref<2x128xf32, #tpu.memory_space<vmem>>, %arg11: memref<128x128xbf16, #tpu.memory_space<vmem>>, %arg12: memref<2x128xf32, #tpu.memory_space<vmem>>, %arg13: memref<128x128xf32, #tpu.memory_space<vmem>>, %arg14: memref<2x128xf32, #tpu.memory_space<vmem>>) attributes {dimension_semantics = [#tpu.dimension_semantics<arbitrary>, #tpu.dimension_semantics<arbitrary>], iteration_bounds = array<i64: 1, 1>, scalar_prefetch = 2 : i64, scratch_operands = 2 : i64, tpu.core_type = #tpu.core_type<tc>, window_params = [{transform_indices = @transform_0, window_bounds = array<i64: 1, 256>}, {transform_indices = @transform_1, window_bounds = array<i64: 256, 8>}, {transform_indices = @transform_2, window_bounds = array<i64: 256, 128>}, {transform_indices = @transform_3, window_bounds = array<i64: 1, 128>}, {pipeline_mode = #tpu.pipeline_mode<synchronous>, transform_indices = @transform_4, window_bounds = array<i64: 8, 128>}, {pipeline_mode = #tpu.pipeline_mode<synchronous>, transform_indices = @transform_5, window_bounds = array<i64: 2, 128, 128>}, {pipeline_mode = #tpu.pipeline_mode<synchronous>, transform_indices = @transform_6, window_bounds = array<i64: 2, 128>}, {pipeline_mode = #tpu.pipeline_mode<synchronous>, transform_indices = @transform_7, window_bounds = array<i64: 128, 128>}, {pipeline_mode = #tpu.pipeline_mode<synchronous>, transform_indices = @transform_8, window_bounds = array<i64: 2, 128>}]} {
    %c0_i32 = arith.constant 0 : i32
    %0 = arith.cmpi eq, %arg0, %c0_i32 : i32
    %c0_i32_0 = arith.constant 0 : i32
    %1 = arith.cmpi eq, %arg1, %c0_i32_0 : i32
    %2 = arith.andi %0, %1 : i1
    %3 = arith.extui %2 : i1 to i32
    %c0_i32_1 = arith.constant 0 : i32
    %4 = arith.cmpi ne, %3, %c0_i32_1 : i32
    scf.if %4 {
      %cst = arith.constant 0.000000e+00 : f32
      %16 = vector.broadcast %cst : f32 to vector<2x128xf32>
      %c0 = arith.constant 0 : index
      %c0_7 = arith.constant 0 : index
      %17 = vector.load %arg14[%c0, %c0_7] : memref<2x128xf32, #tpu.memory_space<vmem>>, vector<2x128xf32>
      tpu.vector_store %arg14[%c0, %c0_7], %16 {strides = array<i32>} : memref<2x128xf32, #tpu.memory_space<vmem>>, vector<2x128xf32>,
    } else {
    }
    %c0_i32_2 = arith.constant 0 : i32
    %5 = arith.cmpi eq, %arg1, %c0_i32_2 : i32
    %6 = arith.extui %5 : i1 to i32
    %c0_i32_3 = arith.constant 0 : i32
    %7 = arith.cmpi ne, %6, %c0_i32_3 : i32
    scf.if %7 {
      %cst = arith.constant 0.000000e+00 : f32
      %16 = vector.broadcast %cst : f32 to vector<128x128xf32>
      %c0 = arith.constant 0 : index
      %c0_7 = arith.constant 0 : index
      %17 = vector.load %arg13[%c0, %c0_7] : memref<128x128xf32, #tpu.memory_space<vmem>>, vector<128x128xf32>
      tpu.vector_store %arg13[%c0, %c0_7], %16 {strides = array<i32>} : memref<128x128xf32, #tpu.memory_space<vmem>>, vector<128x128xf32>,
    } else {
    }
    %8 = arith.index_cast %arg0 : i32 to index
    %9 = memref.load %arg3[%8] : memref<1xi32, #tpu.memory_space<smem>>
    %10 = arith.cmpi slt, %arg1, %9 : i32
    %11 = arith.extui %10 : i1 to i32
    %c0_i32_4 = arith.constant 0 : i32
    %12 = arith.cmpi ne, %11, %c0_i32_4 : i32
    scf.if %12 {
      %c0 = arith.constant 0 : index
      %c0_7 = arith.constant 0 : index
      %16 = vector.load %arg5[%c0, %c0_7] : memref<256x8xbf16, #tpu.memory_space<vmem>>, vector<256x8xbf16>
      %c0_8 = arith.constant 0 : index
      %c0_9 = arith.constant 0 : index
      %17 = vector.load %arg8[%c0_8, %c0_9] : memref<8x128xbf16, #tpu.memory_space<vmem>>, vector<8x128xbf16>
      %cst = arith.constant dense<0.000000e+00> : vector<256x128xf32>
      %18 = tpu.matmul %16, %17, %cst {dimension_numbers = #tpu.dot_dimension_numbers<[1], [0], [0], [1], [0, 0, 1, 1], [], []>} : vector<256x8xbf16>, vector<8x128xbf16>, vector<256x128xf32> -> vector<256x128xf32>
      %c0_10 = arith.constant 0 : index
      %c0_11 = arith.constant 0 : index
      %19 = vector.load %arg6[%c0_10, %c0_11] : memref<256x128xbf16, #tpu.memory_space<vmem>>, vector<256x128xbf16>
      %20 = arith.extf %19 : vector<256x128xbf16> to vector<256x128xf32>
      %21 = arith.mulf %20, %18 : vector<256x128xf32>
      %c0_12 = arith.constant 0 : index
      %c0_13 = arith.constant 0 : index
      %22 = vector.load %arg4[%c0_12, %c0_13] : memref<1x256xi32, #tpu.memory_space<vmem>>, vector<1x256xi32>
      %c128_i32 = arith.constant 128 : i32
      %23 = arith.muli %arg0, %c128_i32 : i32
      %24 = vector.broadcast %23 : i32 to vector<1x256xi32>
      %25 = arith.subi %22, %24 : vector<1x256xi32>
      %26 = tpu.iota {dimensions = array<i32: 0>} : vector<128x256xi32>
      %27 = vector.broadcast %25 : vector<1x256xi32> to vector<128x256xi32>
      %28 = arith.cmpi eq, %26, %27 : vector<128x256xi32>
      %29 = arith.extui %28 : vector<128x256xi1> to vector<128x256xi32>
      %30 = arith.sitofp %29 : vector<128x256xi32> to vector<128x256xf32>
      %31 = arith.truncf %30 : vector<128x256xf32> to vector<128x256xbf16>
      %c0_14 = arith.constant 0 : index
      %c0_15 = arith.constant 0 : index
      %32 = vector.load %arg13[%c0_14, %c0_15] : memref<128x128xf32, #tpu.memory_space<vmem>>, vector<128x128xf32>
      %33 = arith.truncf %21 : vector<256x128xf32> to vector<256x128xbf16>
      %cst_16 = arith.constant dense<0.000000e+00> : vector<128x128xf32>
      %34 = tpu.matmul %31, %33, %cst_16 {dimension_numbers = #tpu.dot_dimension_numbers<[1], [0], [0], [1], [0, 0, 1, 1], [], []>} : vector<128x256xbf16>, vector<256x128xbf16>, vector<128x128xf32> -> vector<128x128xf32>
      %35 = arith.addf %32, %34 : vector<128x128xf32>
      %c0_17 = arith.constant 0 : index
      %c0_18 = arith.constant 0 : index
      %36 = vector.load %arg13[%c0_17, %c0_18] : memref<128x128xf32, #tpu.memory_space<vmem>>, vector<128x128xf32>
      tpu.vector_store %arg13[%c0_17, %c0_18], %35 {strides = array<i32>} : memref<128x128xf32, #tpu.memory_space<vmem>>, vector<128x128xf32>,
    } else {
    }
    %c0_i32_5 = arith.constant 0 : i32
    %13 = arith.cmpi eq, %arg1, %c0_i32_5 : i32
    %14 = arith.extui %13 : i1 to i32
    %c0_i32_6 = arith.constant 0 : i32
    %15 = arith.cmpi ne, %14, %c0_i32_6 : i32
    scf.if %15 {
      %c0 = arith.constant 0 : index
      %c0_7 = arith.constant 0 : index
      %16 = vector.load %arg13[%c0, %c0_7] : memref<128x128xf32, #tpu.memory_space<vmem>>, vector<128x128xf32>
      %17 = arith.truncf %16 : vector<128x128xf32> to vector<128x128xbf16>
      %c0_8 = arith.constant 0 : index
      %c0_9 = arith.constant 0 : index
      %c0_10 = arith.constant 0 : index
      %18 = vector.load %arg9[%c0_8, %c0_9, %c0_10] : memref<2x128x128xbf16, #tpu.memory_space<vmem>>, vector<1x128x128xbf16>
      %19 = vector.shape_cast %18 : vector<1x128x128xbf16> to vector<128x128xbf16>
      %cst = arith.constant dense<0.000000e+00> : vector<128x128xf32>
      %20 = tpu.matmul %17, %19, %cst {dimension_numbers = #tpu.dot_dimension_numbers<[1], [0], [0], [1], [0, 0, 1, 1], [], []>} : vector<128x128xbf16>, vector<128x128xbf16>, vector<128x128xf32> -> vector<128x128xf32>
      %c0_11 = arith.constant 0 : index
      %c0_12 = arith.constant 0 : index
      %21 = vector.load %arg10[%c0_11, %c0_12] : memref<2x128xf32, #tpu.memory_space<vmem>>, vector<1x128xf32>
      %22 = vector.broadcast %21 : vector<1x128xf32> to vector<128x128xf32>
      %23 = arith.addf %20, %22 : vector<128x128xf32>
      %24 = arith.negf %23 : vector<128x128xf32>
      %25 = math.exp %24 : vector<128x128xf32>
      %cst_13 = arith.constant 1.000000e+00 : f32
      %26 = vector.broadcast %cst_13 : f32 to vector<128x128xf32>
      %27 = arith.addf %26, %25 : vector<128x128xf32>
      %28 = arith.divf %26, %27 : vector<128x128xf32>
      %29 = arith.mulf %23, %28 : vector<128x128xf32>
      %30 = arith.truncf %29 : vector<128x128xf32> to vector<128x128xbf16>
      %c1 = arith.constant 1 : index
      %c0_14 = arith.constant 0 : index
      %c0_15 = arith.constant 0 : index
      %31 = vector.load %arg9[%c1, %c0_14, %c0_15] : memref<2x128x128xbf16, #tpu.memory_space<vmem>>, vector<1x128x128xbf16>
      %32 = vector.shape_cast %31 : vector<1x128x128xbf16> to vector<128x128xbf16>
      %cst_16 = arith.constant dense<0.000000e+00> : vector<128x128xf32>
      %33 = tpu.matmul %30, %32, %cst_16 {dimension_numbers = #tpu.dot_dimension_numbers<[1], [0], [0], [1], [0, 0, 1, 1], [], []>} : vector<128x128xbf16>, vector<128x128xbf16>, vector<128x128xf32> -> vector<128x128xf32>
      %c1_17 = arith.constant 1 : index
      %c0_18 = arith.constant 0 : index
      %34 = vector.load %arg10[%c1_17, %c0_18] : memref<2x128xf32, #tpu.memory_space<vmem>>, vector<1x128xf32>
      %35 = vector.broadcast %34 : vector<1x128xf32> to vector<128x128xf32>
      %36 = arith.addf %33, %35 : vector<128x128xf32>
      %37 = arith.negf %36 : vector<128x128xf32>
      %38 = math.exp %37 : vector<128x128xf32>
      %cst_19 = arith.constant 1.000000e+00 : f32
      %39 = vector.broadcast %cst_19 : f32 to vector<128x128xf32>
      %40 = arith.addf %39, %38 : vector<128x128xf32>
      %41 = arith.divf %39, %40 : vector<128x128xf32>
      %42 = arith.mulf %36, %41 : vector<128x128xf32>
      %43 = arith.truncf %42 : vector<128x128xf32> to vector<128x128xbf16>
      %c0_20 = arith.constant 0 : index
      %c0_21 = arith.constant 0 : index
      %44 = vector.load %arg11[%c0_20, %c0_21] : memref<128x128xbf16, #tpu.memory_space<vmem>>, vector<128x128xbf16>
      %cst_22 = arith.constant dense<0.000000e+00> : vector<128x128xf32>
      %45 = tpu.matmul %43, %44, %cst_22 {dimension_numbers = #tpu.dot_dimension_numbers<[1], [0], [0], [1], [0, 0, 1, 1], [], []>} : vector<128x128xbf16>, vector<128x128xbf16>, vector<128x128xf32> -> vector<128x128xf32>
      %c0_23 = arith.constant 0 : index
      %c0_24 = arith.constant 0 : index
      %46 = vector.load %arg7[%c0_23, %c0_24] : memref<1x128xi32, #tpu.memory_space<vmem>>, vector<1x128xi32>
      %47 = tpu.iota {dimensions = array<i32: 0>} : vector<2x128xi32>
      %48 = vector.broadcast %46 : vector<1x128xi32> to vector<2x128xi32>
      %49 = arith.cmpi eq, %47, %48 : vector<2x128xi32>
      %50 = arith.extui %49 : vector<2x128xi1> to vector<2x128xi32>
      %51 = arith.sitofp %50 : vector<2x128xi32> to vector<2x128xf32>
      %52 = arith.truncf %51 : vector<2x128xf32> to vector<2x128xbf16>
      %c0_25 = arith.constant 0 : index
      %c0_26 = arith.constant 0 : index
      %53 = vector.load %arg14[%c0_25, %c0_26] : memref<2x128xf32, #tpu.memory_space<vmem>>, vector<2x128xf32>
      %54 = arith.truncf %45 : vector<128x128xf32> to vector<128x128xbf16>
      %cst_27 = arith.constant dense<0.000000e+00> : vector<2x128xf32>
      %55 = tpu.matmul %52, %54, %cst_27 {dimension_numbers = #tpu.dot_dimension_numbers<[1], [0], [0], [1], [0, 0, 1, 1], [], []>} : vector<2x128xbf16>, vector<128x128xbf16>, vector<2x128xf32> -> vector<2x128xf32>
      %56 = arith.addf %53, %55 : vector<2x128xf32>
      %c0_28 = arith.constant 0 : index
      %c0_29 = arith.constant 0 : index
      %57 = vector.load %arg14[%c0_28, %c0_29] : memref<2x128xf32, #tpu.memory_space<vmem>>, vector<2x128xf32>
      tpu.vector_store %arg14[%c0_28, %c0_29], %56 {strides = array<i32>} : memref<2x128xf32, #tpu.memory_space<vmem>>, vector<2x128xf32>,
      %c0_30 = arith.constant 0 : index
      %c0_31 = arith.constant 0 : index
      %58 = vector.load %arg14[%c0_30, %c0_31] : memref<2x128xf32, #tpu.memory_space<vmem>>, vector<2x128xf32>
      %c0_32 = arith.constant 0 : index
      %c0_33 = arith.constant 0 : index
      %59 = vector.load %arg12[%c0_32, %c0_33] : memref<2x128xf32, #tpu.memory_space<vmem>>, vector<2x128xf32>
      tpu.vector_store %arg12[%c0_32, %c0_33], %58 {strides = array<i32>} : memref<2x128xf32, #tpu.memory_space<vmem>>, vector<2x128xf32>,
    } else {
    }
    return
  }
  func.func @transform_0(%arg0: i32, %arg1: i32, %arg2: memref<1xi32, #tpu.memory_space<smem>>, %arg3: memref<1xi32, #tpu.memory_space<smem>>) -> (i32, i32) {
    %0 = arith.index_cast %arg0 : i32 to index
    %1 = memref.load %arg3[%0] : memref<1xi32, #tpu.memory_space<smem>>
    %c1_i32 = arith.constant 1 : i32
    %2 = arith.subi %1, %c1_i32 : i32
    %c0_i32 = arith.constant 0 : i32
    %3 = arith.maxsi %2, %c0_i32 : i32
    %4 = arith.minsi %arg1, %3 : i32
    %5 = arith.index_cast %arg0 : i32 to index
    %6 = memref.load %arg2[%5] : memref<1xi32, #tpu.memory_space<smem>>
    %7 = arith.addi %6, %4 : i32
    %c0_i32_0 = arith.constant 0 : i32
    %c0_i32_1 = arith.constant 0 : i32
    return %c0_i32_0, %7 : i32, i32
  }
  func.func @transform_1(%arg0: i32, %arg1: i32, %arg2: memref<1xi32, #tpu.memory_space<smem>>, %arg3: memref<1xi32, #tpu.memory_space<smem>>) -> (i32, i32) {
    %0 = arith.index_cast %arg0 : i32 to index
    %1 = memref.load %arg3[%0] : memref<1xi32, #tpu.memory_space<smem>>
    %c1_i32 = arith.constant 1 : i32
    %2 = arith.subi %1, %c1_i32 : i32
    %c0_i32 = arith.constant 0 : i32
    %3 = arith.maxsi %2, %c0_i32 : i32
    %4 = arith.minsi %arg1, %3 : i32
    %5 = arith.index_cast %arg0 : i32 to index
    %6 = memref.load %arg2[%5] : memref<1xi32, #tpu.memory_space<smem>>
    %7 = arith.addi %6, %4 : i32
    %c0_i32_0 = arith.constant 0 : i32
    %c0_i32_1 = arith.constant 0 : i32
    return %7, %c0_i32_0 : i32, i32
  }
  func.func @transform_2(%arg0: i32, %arg1: i32, %arg2: memref<1xi32, #tpu.memory_space<smem>>, %arg3: memref<1xi32, #tpu.memory_space<smem>>) -> (i32, i32) {
    %0 = arith.index_cast %arg0 : i32 to index
    %1 = memref.load %arg3[%0] : memref<1xi32, #tpu.memory_space<smem>>
    %c1_i32 = arith.constant 1 : i32
    %2 = arith.subi %1, %c1_i32 : i32
    %c0_i32 = arith.constant 0 : i32
    %3 = arith.maxsi %2, %c0_i32 : i32
    %4 = arith.minsi %arg1, %3 : i32
    %5 = arith.index_cast %arg0 : i32 to index
    %6 = memref.load %arg2[%5] : memref<1xi32, #tpu.memory_space<smem>>
    %7 = arith.addi %6, %4 : i32
    %c0_i32_0 = arith.constant 0 : i32
    %c0_i32_1 = arith.constant 0 : i32
    return %7, %c0_i32_0 : i32, i32
  }
  func.func @transform_3(%arg0: i32, %arg1: i32, %arg2: memref<1xi32, #tpu.memory_space<smem>>, %arg3: memref<1xi32, #tpu.memory_space<smem>>) -> (i32, i32) {
    %c0_i32 = arith.constant 0 : i32
    %c0_i32_0 = arith.constant 0 : i32
    return %c0_i32, %arg0 : i32, i32
  }
  func.func @transform_4(%arg0: i32, %arg1: i32, %arg2: memref<1xi32, #tpu.memory_space<smem>>, %arg3: memref<1xi32, #tpu.memory_space<smem>>) -> (i32, i32) {
    %c0_i32 = arith.constant 0 : i32
    %c0_i32_0 = arith.constant 0 : i32
    %c0_i32_1 = arith.constant 0 : i32
    return %c0_i32, %c0_i32_0 : i32, i32
  }
  func.func @transform_5(%arg0: i32, %arg1: i32, %arg2: memref<1xi32, #tpu.memory_space<smem>>, %arg3: memref<1xi32, #tpu.memory_space<smem>>) -> (i32, i32, i32) {
    %c0_i32 = arith.constant 0 : i32
    %c0_i32_0 = arith.constant 0 : i32
    %c0_i32_1 = arith.constant 0 : i32
    %c0_i32_2 = arith.constant 0 : i32
    return %c0_i32, %c0_i32_0, %c0_i32_1 : i32, i32, i32
  }
  func.func @transform_6(%arg0: i32, %arg1: i32, %arg2: memref<1xi32, #tpu.memory_space<smem>>, %arg3: memref<1xi32, #tpu.memory_space<smem>>) -> (i32, i32) {
    %c0_i32 = arith.constant 0 : i32
    %c0_i32_0 = arith.constant 0 : i32
    %c0_i32_1 = arith.constant 0 : i32
    return %c0_i32, %c0_i32_0 : i32, i32
  }
  func.func @transform_7(%arg0: i32, %arg1: i32, %arg2: memref<1xi32, #tpu.memory_space<smem>>, %arg3: memref<1xi32, #tpu.memory_space<smem>>) -> (i32, i32) {
    %c0_i32 = arith.constant 0 : i32
    %c0_i32_0 = arith.constant 0 : i32
    %c0_i32_1 = arith.constant 0 : i32
    return %c0_i32, %c0_i32_0 : i32, i32
  }
  func.func @transform_8(%arg0: i32, %arg1: i32, %arg2: memref<1xi32, #tpu.memory_space<smem>>, %arg3: memref<1xi32, #tpu.memory_space<smem>>) -> (i32, i32) {
    %c0_i32 = arith.constant 0 : i32
    %c0_i32_0 = arith.constant 0 : i32
    %c0_i32_1 = arith.constant 0 : i32
    return %c0_i32, %c0_i32_0 : i32, i32
  }
}

</mosaic_0001>

<llo_original>
// kernel: tpu_custom_call.1
$region0: #{tpu_custom_call.1}
  #allocation0 [shape = 'u32[]', space=smem, size = 0x4, offset = 0x4, fixed_abs, tag = 'smem constant byte address 0x4 - core index']
  #allocation1 [shape = 'u32[144,128]{1,0:T(1,128)}', space=vmem, size = 0x12000, scoped, tag = 'internal scratch']
  #allocation2 [shape = 'f32[128,128]{1,0:T(8,128)}', space=vmem, size = 0x10000, scoped, tag = 'scratch operand']
  #allocation3 [shape = 'f32[2,128]{1,0:T(2,128)}', space=vmem, size = 0x400, scoped, tag = 'scratch operand']
  #allocation4 [shape = 's32[1]{0}', space=sflag, size = 0x4, scoped, tag = 'scoped memory for tpu_custom_call.1']
  #allocation5 [shape = 's32[1]{0:T(128)S(6)}', space=smem, size = 0x200, scoped, tag = 'prefetched SMEM operand 0']
  #allocation6 [shape = 's32[1]{0:T(128)S(6)}', space=smem, size = 0x200, scoped, tag = 'prefetched SMEM operand 1']
  %s0 = inlined_call_operand.<no memory space> [shape: s32[1], index: 0, kind: input, shape index: {}]
  %s1 = inlined_call_operand.<no memory space> [shape: s32[1], index: 1, kind: input, shape index: {}]
  %s2 = inlined_call_operand.vmem [shape: s32[1,256], index: 2, kind: input, shape index: {}]
  %s3 = inlined_call_operand.vmem [shape: bf16[256,8], index: 3, kind: input, shape index: {}]
  %s4 = inlined_call_operand.vmem [shape: bf16[256,128], index: 4, kind: input, shape index: {}]
  %s5 = inlined_call_operand.vmem [shape: s32[1,128], index: 5, kind: input, shape index: {}]
  %s6 = inlined_call_operand.vmem [shape: bf16[8,128], index: 6, kind: input, shape index: {}]
  %s7 = inlined_call_operand.hbm [shape: bf16[2,128,128], index: 7, kind: input, shape index: {}]
  %s8 = inlined_call_operand.vmem [shape: f32[2,128], index: 8, kind: input, shape index: {}]
  %s9 = inlined_call_operand.hbm [shape: bf16[128,128], index: 9, kind: input, shape index: {}]
  %s10 = inlined_call_operand.hbm [shape: f32[2,128], index: 10, kind: output, shape index: {}]
  %s11 = sld [smem:[#allocation0]]
  $region66: #{tpu_custom_call.1} parent=0
    _
  %s13 = ssub.s32 1, %s11
  %s14 = scalar_select 0, %s13, %s11
  %15 = sst [smem:[#allocation5]] %s0
  %16 = sst [smem:[#allocation6]] %s1
  $region1: #{tpu_custom_call.1} parent=0
    #allocation7 [shape = 'u8[65536]{0}', space=vmem, size = 0x10000, scoped, tag = 'input window, operand 7, single buffered']
    #allocation8 [shape = 's32[1]{0}', space=sflag, size = 0x4, scoped, tag = 'scoped memory for tpu_custom_call.1']
    #allocation9 [shape = 's32[1]{0}', space=sflag, size = 0x4, scoped, tag = 'scoped memory for tpu_custom_call.1']
    #allocation10 [shape = 'u8[32768]{0}', space=vmem, size = 0x8000, scoped, tag = 'input window, operand 9, single buffered']
    #allocation11 [shape = 's32[1]{0}', space=sflag, size = 0x4, scoped, tag = 'scoped memory for tpu_custom_call.1']
    #allocation12 [shape = 'u8[1024]{0}', space=vmem, size = 0x400, scoped, tag = 'output window, operand 0, single buffered']
    %17 = vsyncpa [#allocation8], 0
    %18 = vsyncpa [#allocation11], 0
    %19 = vsyncpa [#allocation9], 0
    // Predicated region
    $region2: #{tpu_custom_call.1} parent=1 // pred_check
      _
    $region3: #{tpu_custom_call.1} parent=1 // pred_check_branch
      %21 = sbr.rel (0) target = $region5
    $region4: #{tpu_custom_call.1} parent=1 // pred_region
      %s22 = sld [smem:[#allocation6]]
      %s23 = ssub.s32 %s22, 1
      %p24 = scmp.gt.s32.totalorder %s23, 0
      %s25 = scalar_select %p24, %s23, 0
      %p26 = scmp.lt.s32.totalorder 0, %s25
      %s27 = scalar_select %p26, 0, %s25
      %s28 = sld [smem:[#allocation5]]
      %s29 = sadd.s32 %s28, %s27
      %s30 = smul.u32 2, %s29
      %p31 = scmp.lt.s32.totalorder %s30, 1
      %s32 = scalar_select %p31, %s30, 1
      %s33 = scalar_lea.vmem %s2, %s32
      %s34 = sld [smem:[#allocation6]]
      %s35 = ssub.s32 %s34, 1
      %p36 = scmp.gt.s32.totalorder %s35, 0
      %s37 = scalar_select %p36, %s35, 0
      %p38 = scmp.lt.s32.totalorder 0, %s37
      %s39 = scalar_select %p38, 0, %s37
      %s40 = sld [smem:[#allocation5]]
      %s41 = sadd.s32 %s40, %s39
      %s42 = smul.u32 2, %s41
    $region5: #{tpu_custom_call.1} parent=1 // pred_fallthru
      _
    // Predicated region
    $region6: #{tpu_custom_call.1} parent=1 // pred_check
      _
    $region7: #{tpu_custom_call.1} parent=1 // pred_check_branch
      %44 = sbr.rel (0) target = $region9
    $region8: #{tpu_custom_call.1} parent=1 // pred_region
      %s45 = sld [smem:[#allocation6]]
      %s46 = ssub.s32 %s45, 1
      %p47 = scmp.gt.s32.totalorder %s46, 0
      %s48 = scalar_select %p47, %s46, 0
      %p49 = scmp.lt.s32.totalorder 0, %s48
      %s50 = scalar_select %p49, 0, %s48
      %s51 = sld [smem:[#allocation5]]
      %s52 = sadd.s32 %s51, %s50
      %s53 = smul.u32 32, %s52
      %p54 = scmp.lt.s32.totalorder %s53, 31
      %s55 = scalar_select %p54, %s53, 31
      %s56 = smul.addr %s55, 4
      %s57 = scalar_lea.vmem %s3, %s56
      %s58 = sld [smem:[#allocation6]]
      %s59 = ssub.s32 %s58, 1
      %p60 = scmp.gt.s32.totalorder %s59, 0
      %s61 = scalar_select %p60, %s59, 0
      %p62 = scmp.lt.s32.totalorder 0, %s61
      %s63 = scalar_select %p62, 0, %s61
      %s64 = sld [smem:[#allocation5]]
      %s65 = sadd.s32 %s64, %s63
      %s66 = smul.u32 32, %s65
    $region9: #{tpu_custom_call.1} parent=1 // pred_fallthru
      _
    // Predicated region
    $region10: #{tpu_custom_call.1} parent=1 // pred_check
      _
    $region11: #{tpu_custom_call.1} parent=1 // pred_check_branch
      %68 = sbr.rel (0) target = $region13
    $region12: #{tpu_custom_call.1} parent=1 // pred_region
      %s69 = sld [smem:[#allocation6]]
      %s70 = ssub.s32 %s69, 1
      %p71 = scmp.gt.s32.totalorder %s70, 0
      %s72 = scalar_select %p71, %s70, 0
      %p73 = scmp.lt.s32.totalorder 0, %s72
      %s74 = scalar_select %p73, 0, %s72
      %s75 = sld [smem:[#allocation5]]
      %s76 = sadd.s32 %s75, %s74
      %s77 = smul.u32 32, %s76
      %p78 = scmp.lt.s32.totalorder %s77, 31
      %s79 = scalar_select %p78, %s77, 31
      %s80 = smul.addr %s79, 4
      %s81 = scalar_lea.vmem %s4, %s80
      %s82 = sld [smem:[#allocation6]]
      %s83 = ssub.s32 %s82, 1
      %p84 = scmp.gt.s32.totalorder %s83, 0
      %s85 = scalar_select %p84, %s83, 0
      %p86 = scmp.lt.s32.totalorder 0, %s85
      %s87 = scalar_select %p86, 0, %s85
      %s88 = sld [smem:[#allocation5]]
      %s89 = sadd.s32 %s88, %s87
      %s90 = smul.u32 32, %s89
    $region13: #{tpu_custom_call.1} parent=1 // pred_fallthru
      _
    // Predicated region
    $region14: #{tpu_custom_call.1} parent=1 // pred_check
      _
    $region15: #{tpu_custom_call.1} parent=1 // pred_check_branch
      %92 = sbr.rel (0) target = $region17
    $region16: #{tpu_custom_call.1} parent=1 // pred_region
      _
    $region17: #{tpu_custom_call.1} parent=1 // pred_fallthru
      _
    // Predicated region
    $region18: #{tpu_custom_call.1} parent=1 // pred_check
      _
    $region19: #{tpu_custom_call.1} parent=1 // pred_check_branch
      %94 = sbr.rel (0) target = $region21
    $region20: #{tpu_custom_call.1} parent=1 // pred_region
      _
    $region21: #{tpu_custom_call.1} parent=1 // pred_fallthru
      _
    // Predicated region
    $region22: #{tpu_custom_call.1} parent=1 // pred_check
      _
    $region23: #{tpu_custom_call.1} parent=1 // pred_check_branch
      %96 = sbr.rel (0) target = $region25
    $region24: #{tpu_custom_call.1} parent=1 // pred_region
      %s98 = ssub.s32 2048, 2048
      %99 = vsyncadd [#allocation8], %s98
      %s100 = sshll.u32 [#allocation7], 4
      %s101 = int_to_ptr.vmem [resolvable:$true] %s100
      %106 = dma.hbm_to_vmem [thread:$0]  %s7, 2048, %s101, [#allocation8], 64, 64, 4
    $region25: #{tpu_custom_call.1} parent=1 // pred_fallthru
      _
    // Predicated region
    $region26: #{tpu_custom_call.1} parent=1 // pred_check
      _
    $region27: #{tpu_custom_call.1} parent=1 // pred_check_branch
      %108 = sbr.rel (0) target = $region29
    $region28: #{tpu_custom_call.1} parent=1 // pred_region
      _
    $region29: #{tpu_custom_call.1} parent=1 // pred_fallthru
      _
    // Predicated region
    $region30: #{tpu_custom_call.1} parent=1 // pred_check
      _
    $region31: #{tpu_custom_call.1} parent=1 // pred_check_branch
      %110 = sbr.rel (0) target = $region33
    $region32: #{tpu_custom_call.1} parent=1 // pred_region
      %s112 = ssub.s32 1024, 1024
      %113 = vsyncadd [#allocation11], %s112
      %s114 = sshll.u32 [#allocation10], 4
      %s115 = int_to_ptr.vmem [resolvable:$true] %s114
      %120 = dma.hbm_to_vmem [thread:$0]  %s9, 1024, %s115, [#allocation11], 64, 64, 4
    $region33: #{tpu_custom_call.1} parent=1 // pred_fallthru
      _
    // Predicated region
    $region34: #{tpu_custom_call.1} parent=1 // pred_check
      _
    $region35: #{tpu_custom_call.1} parent=1 // pred_check_branch
      %122 = sbr.rel (0) target = $region37
    $region36: #{tpu_custom_call.1} parent=1 // pred_region
      %123 = dma.done [#allocation8], 2048
    $region37: #{tpu_custom_call.1} parent=1 // pred_fallthru
      _
    // Predicated region
    $region38: #{tpu_custom_call.1} parent=1 // pred_check
      _
    $region39: #{tpu_custom_call.1} parent=1 // pred_check_branch
      %125 = sbr.rel (0) target = $region41
    $region40: #{tpu_custom_call.1} parent=1 // pred_region
      %126 = dma.done [#allocation11], 1024
    $region41: #{tpu_custom_call.1} parent=1 // pred_fallthru
      _
    %s127 = sld [smem:[#allocation6]]
    %s128 = ssub.s32 %s127, 1
    %p129 = scmp.gt.s32.totalorder %s128, 0
    %s130 = scalar_select %p129, %s128, 0
    %p131 = scmp.lt.s32.totalorder 0, %s130
    %s132 = scalar_select %p131, 0, %s130
    %s133 = sld [smem:[#allocation5]]
    %s134 = sadd.s32 %s133, %s132
    %s135 = smul.u32 2, %s134
    %p136 = scmp.lt.s32.totalorder %s135, 1
    %s137 = scalar_select %p136, %s135, 1
    %s138 = scalar_lea.vmem %s2, %s137
    %s139 = sld [smem:[#allocation6]]
    %s140 = ssub.s32 %s139, 1
    %p141 = scmp.gt.s32.totalorder %s140, 0
    %s142 = scalar_select %p141, %s140, 0
    %p143 = scmp.lt.s32.totalorder 0, %s142
    %s144 = scalar_select %p143, 0, %s142
    %s145 = sld [smem:[#allocation5]]
    %s146 = sadd.s32 %s145, %s144
    %s147 = smul.u32 32, %s146
    %p148 = scmp.lt.s32.totalorder %s147, 31
    %s149 = scalar_select %p148, %s147, 31
    %s150 = smul.addr %s149, 4
    %s151 = scalar_lea.vmem %s3, %s150
    %s152 = sld [smem:[#allocation6]]
    %s153 = ssub.s32 %s152, 1
    %p154 = scmp.gt.s32.totalorder %s153, 0
    %s155 = scalar_select %p154, %s153, 0
    %p156 = scmp.lt.s32.totalorder 0, %s155
    %s157 = scalar_select %p156, 0, %s155
    %s158 = sld [smem:[#allocation5]]
    %s159 = sadd.s32 %s158, %s157
    %s160 = smul.u32 32, %s159
    %p161 = scmp.lt.s32.totalorder %s160, 31
    %s162 = scalar_select %p161, %s160, 31
    %s163 = smul.addr %s162, 4
    %s164 = scalar_lea.vmem %s4, %s163
    %s165 = sld [smem:[#allocation6]]
    %s166 = ssub.s32 %s165, 1
    %p167 = scmp.gt.s32.totalorder %s166, 0
    %s168 = scalar_select %p167, %s166, 0
    %p169 = scmp.lt.s32.totalorder 0, %s168
    %s170 = scalar_select %p169, 0, %s168
    %s171 = sld [smem:[#allocation5]]
    %s172 = sadd.s32 %s171, %s170
    %s173 = smul.u32 2, %s172
    %p174 = scmp.lt.s32.totalorder %s173, 1
    %s175 = scalar_select %p174, %s173, 1
    %s176 = scalar_lea.vmem %s2, %s175
    %s177 = sld [smem:[#allocation6]]
    %s178 = ssub.s32 %s177, 1
    %p179 = scmp.gt.s32.totalorder %s178, 0
    %s180 = scalar_select %p179, %s178, 0
    %p181 = scmp.lt.s32.totalorder 0, %s180
    %s182 = scalar_select %p181, 0, %s180
    %s183 = sld [smem:[#allocation5]]
    %s184 = sadd.s32 %s183, %s182
    %s185 = smul.u32 2, %s184
    %s186 = sld [smem:[#allocation6]]
    %s187 = ssub.s32 %s186, 1
    %p188 = scmp.gt.s32.totalorder %s187, 0
    %s189 = scalar_select %p188, %s187, 0
    %p190 = scmp.lt.s32.totalorder 0, %s189
    %s191 = scalar_select %p190, 0, %s189
    %s192 = sld [smem:[#allocation5]]
    %s193 = sadd.s32 %s192, %s191
    %s194 = smul.u32 32, %s193
    %p195 = scmp.lt.s32.totalorder %s194, 31
    %s196 = scalar_select %p195, %s194, 31
    %s197 = smul.addr %s196, 4
    %s198 = scalar_lea.vmem %s3, %s197
    %s199 = sld [smem:[#allocation6]]
    %s200 = ssub.s32 %s199, 1
    %p201 = scmp.gt.s32.totalorder %s200, 0
    %s202 = scalar_select %p201, %s200, 0
    %p203 = scmp.lt.s32.totalorder 0, %s202
    %s204 = scalar_select %p203, 0, %s202
    %s205 = sld [smem:[#allocation5]]
    %s206 = sadd.s32 %s205, %s204
    %s207 = smul.u32 32, %s206
    %s208 = sld [smem:[#allocation6]]
    %s209 = ssub.s32 %s208, 1
    %p210 = scmp.gt.s32.totalorder %s209, 0
    %s211 = scalar_select %p210, %s209, 0
    %p212 = scmp.lt.s32.totalorder 0, %s211
    %s213 = scalar_select %p212, 0, %s211
    %s214 = sld [smem:[#allocation5]]
    %s215 = sadd.s32 %s214, %s213
    %s216 = smul.u32 32, %s215
    %p217 = scmp.lt.s32.totalorder %s216, 31
    %s218 = scalar_select %p217, %s216, 31
    %s219 = smul.addr %s218, 4
    %s220 = scalar_lea.vmem %s4, %s219
    %s221 = sld [smem:[#allocation6]]
    %s222 = ssub.s32 %s221, 1
    %p223 = scmp.gt.s32.totalorder %s222, 0
    %s224 = scalar_select %p223, %s222, 0
    %p225 = scmp.lt.s32.totalorder 0, %s224
    %s226 = scalar_select %p225, 0, %s224
    %s227 = sld [smem:[#allocation5]]
    %s228 = sadd.s32 %s227, %s226
    %s229 = smul.u32 32, %s228
    %p231 = scmp.eq.s32.totalorder 0, 0
    %p232 = scmp.eq.s32.totalorder 0, 0
    %p233 = pnand %p231, %p232
    %p234 = pneg %p233
    // Predicated region
    $region42: #{tpu_custom_call.1} parent=1 // pred_check
      _
    $region43: #{tpu_custom_call.1} parent=1 // pred_check_branch
      %236 = sbr.rel (%p233) target = $region45
    $region44: #{tpu_custom_call.1} parent=1 // pred_region
      %237 = vst [vmem:[#allocation3] sm:$0x3] 0.0
    $region45: #{tpu_custom_call.1} parent=1 // pred_fallthru
      _
    // Predicated region
    $region46: #{tpu_custom_call.1} parent=1 // pred_check
      %p238 = pneg %p232
    $region47: #{tpu_custom_call.1} parent=1 // pred_check_branch
      %240 = sbr.rel (%p238) target = $region49
    $region48: #{tpu_custom_call.1} parent=1 // pred_region
      %241 = vst [vmem:[#allocation2] sm:$0xff] 0.0
      %242 = vst [vmem:[#allocation2 + $0x8] sm:$0xff] 0.0
      %243 = vst [vmem:[#allocation2 + $0x10] sm:$0xff] 0.0
      %244 = vst [vmem:[#allocation2 + $0x18] sm:$0xff] 0.0
      %245 = vst [vmem:[#allocation2 + $0x20] sm:$0xff] 0.0
      %246 = vst [vmem:[#allocation2 + $0x28] sm:$0xff] 0.0
      %247 = vst [vmem:[#allocation2 + $0x30] sm:$0xff] 0.0
      %248 = vst [vmem:[#allocation2 + $0x38] sm:$0xff] 0.0
      %249 = vst [vmem:[#allocation2 + $0x40] sm:$0xff] 0.0
      %250 = vst [vmem:[#allocation2 + $0x48] sm:$0xff] 0.0
      %251 = vst [vmem:[#allocation2 + $0x50] sm:$0xff] 0.0
      %252 = vst [vmem:[#allocation2 + $0x58] sm:$0xff] 0.0
      %253 = vst [vmem:[#allocation2 + $0x60] sm:$0xff] 0.0
      %254 = vst [vmem:[#allocation2 + $0x68] sm:$0xff] 0.0
      %255 = vst [vmem:[#allocation2 + $0x70] sm:$0xff] 0.0
      %256 = vst [vmem:[#allocation2 + $0x78] sm:$0xff] 0.0
    $region49: #{tpu_custom_call.1} parent=1 // pred_fallthru
      _
    %s257 = sld [smem:[#allocation6]]
    %p258 = scmp.lt.s32.totalorder 0, %s257
    // Predicated region
    $region50: #{tpu_custom_call.1} parent=1 // pred_check
      %p259 = pneg %p258
    $region51: #{tpu_custom_call.1} parent=1 // pred_check_branch
      %261 = sbr.rel (%p259) target = $region53
    $region52: #{tpu_custom_call.1} parent=1 // pred_region
      %v262 = vld [vmem:[%s198] sm:$0xf]
      %v263 = vld [vmem:[%s198 + $0x4] sm:$0xf]
      %v264 = vld [vmem:[%s198 + $0x8] sm:$0xf]
      %v265 = vld [vmem:[%s198 + $0xc] sm:$0xf]
      %v266 = vld [vmem:[%s198 + $0x10] sm:$0xf]
      %v267 = vld [vmem:[%s198 + $0x14] sm:$0xf]
      %v268 = vld [vmem:[%s198 + $0x18] sm:$0xf]
      %v269 = vld [vmem:[%s198 + $0x1c] sm:$0xf]
      %v270 = vld [vmem:[%s198 + $0x20] sm:$0xf]
      %v271 = vld [vmem:[%s198 + $0x24] sm:$0xf]
      %v272 = vld [vmem:[%s198 + $0x28] sm:$0xf]
      %v273 = vld [vmem:[%s198 + $0x2c] sm:$0xf]
      %v274 = vld [vmem:[%s198 + $0x30] sm:$0xf]
      %v275 = vld [vmem:[%s198 + $0x34] sm:$0xf]
      %v276 = vld [vmem:[%s198 + $0x38] sm:$0xf]
      %v277 = vld [vmem:[%s198 + $0x3c] sm:$0xf]
      %v278 = vld [vmem:[%s198 + $0x40] sm:$0xf]
      %v279 = vld [vmem:[%s198 + $0x44] sm:$0xf]
      %v280 = vld [vmem:[%s198 + $0x48] sm:$0xf]
      %v281 = vld [vmem:[%s198 + $0x4c] sm:$0xf]
      %v282 = vld [vmem:[%s198 + $0x50] sm:$0xf]
      %v283 = vld [vmem:[%s198 + $0x54] sm:$0xf]
      %v284 = vld [vmem:[%s198 + $0x58] sm:$0xf]
      %v285 = vld [vmem:[%s198 + $0x5c] sm:$0xf]
      %v286 = vld [vmem:[%s198 + $0x60] sm:$0xf]
      %v287 = vld [vmem:[%s198 + $0x64] sm:$0xf]
      %v288 = vld [vmem:[%s198 + $0x68] sm:$0xf]
      %v289 = vld [vmem:[%s198 + $0x6c] sm:$0xf]
      %v290 = vld [vmem:[%s198 + $0x70] sm:$0xf]
      %v291 = vld [vmem:[%s198 + $0x74] sm:$0xf]
      %v292 = vld [vmem:[%s198 + $0x78] sm:$0xf]
      %v293 = vld [vmem:[%s198 + $0x7c] sm:$0xf]
      %v294 = vld [vmem:[%s6] sm:$0xf]
      %v327 = vunpack.c.l.b16 %v262
      %v328 = vunpack.c.l.b16 %v263
      %v329 = vunpack.c.l.b16 %v264
      %v330 = vunpack.c.l.b16 %v265
      %v331 = vunpack.c.l.b16 %v266
      %v332 = vunpack.c.l.b16 %v267
      %v333 = vunpack.c.l.b16 %v268
      %v334 = vunpack.c.l.b16 %v269
      %v335 = vunpack.c.l.b16 %v270
      %v336 = vunpack.c.l.b16 %v271
      %v337 = vunpack.c.l.b16 %v272
      %v338 = vunpack.c.l.b16 %v273
      %v339 = vunpack.c.l.b16 %v274
      %v340 = vunpack.c.l.b16 %v275
      %v341 = vunpack.c.l.b16 %v276
      %v342 = vunpack.c.l.b16 %v277
      %v343 = vunpack.c.l.b16 %v278
      %v344 = vunpack.c.l.b16 %v279
      %v345 = vunpack.c.l.b16 %v280
      %v346 = vunpack.c.l.b16 %v281
      %v347 = vunpack.c.l.b16 %v282
      %v348 = vunpack.c.l.b16 %v283
      %v349 = vunpack.c.l.b16 %v284
      %v350 = vunpack.c.l.b16 %v285
      %v351 = vunpack.c.l.b16 %v286
      %v352 = vunpack.c.l.b16 %v287
      %v353 = vunpack.c.l.b16 %v288
      %v354 = vunpack.c.l.b16 %v289
      %v355 = vunpack.c.l.b16 %v290
      %v356 = vunpack.c.l.b16 %v291
      %v357 = vunpack.c.l.b16 %v292
      %v358 = vunpack.c.l.b16 %v293
      %v359 = vpack.c.b16 %v328, %v327
      %v360 = vpack.c.b16 %v330, %v329
      %v361 = vpack.c.b16 %v332, %v331
      %v362 = vpack.c.b16 %v334, %v333
      %v363 = vpack.c.b16 %v336, %v335
      %v364 = vpack.c.b16 %v338, %v337
      %v365 = vpack.c.b16 %v340, %v339
      %v366 = vpack.c.b16 %v342, %v341
      %v367 = vpack.c.b16 %v344, %v343
      %v368 = vpack.c.b16 %v346, %v345
      %v369 = vpack.c.b16 %v348, %v347
      %v370 = vpack.c.b16 %v350, %v349
      %v371 = vpack.c.b16 %v352, %v351
      %v372 = vpack.c.b16 %v354, %v353
      %v373 = vpack.c.b16 %v356, %v355
      %v374 = vpack.c.b16 %v358, %v357
      %vm375 = vcmask 64512
      %v377 = vsel %vm375, %v359, 0
      %v380 = vsel %vm375, %v360, 0
      %v383 = vsel %vm375, %v361, 0
      %v386 = vsel %vm375, %v362, 0
      %v389 = vsel %vm375, %v363, 0
      %v392 = vsel %vm375, %v364, 0
      %v395 = vsel %vm375, %v365, 0
      %v398 = vsel %vm375, %v366, 0
      %v401 = vsel %vm375, %v367, 0
      %v404 = vsel %vm375, %v368, 0
      %v407 = vsel %vm375, %v369, 0
      %v410 = vsel %vm375, %v370, 0
      %v413 = vsel %vm375, %v371, 0
      %v416 = vsel %vm375, %v372, 0
      %v419 = vsel %vm375, %v373, 0
      %v422 = vsel %vm375, %v374, 0
      %vm424 = vcmask 1043456
      %v426 = vsel %vm424, %v294, 0
      %428 = vmatprep.subr.bf16.mxu0 0
      %429 = vmatpush1.bf16.msra.mxu0 %v426
      %430 = vmatprep.subr.bf16.mxu0 0
      %431 = vmatpush1.bf16.msra.mxu0 0
      %432 = vmatprep.subr.bf16.mxu0 0
      %433 = vmatpush1.bf16.msra.mxu0 0
      %434 = vmatprep.subr.bf16.mxu0 0
      %435 = vmatpush1.bf16.msra.mxu0 0
      %436 = vmatprep.subr.bf16.mxu0 0
      %437 = vmatpush1.bf16.msra.mxu0 0
      %438 = vmatprep.subr.bf16.mxu0 0
      %439 = vmatpush1.bf16.msra.mxu0 0
      %440 = vmatprep.subr.bf16.mxu0 0
      %441 = vmatpush1.bf16.msra.mxu0 0
      %442 = vmatprep.subr.bf16.mxu0 0
      %443 = vmatpush1.bf16.msra.mxu0 0
      %444 = vmatprep.subr.bf16.mxu0 0
      %445 = vmatpush1.bf16.msra.mxu0 0
      %446 = vmatprep.subr.bf16.mxu0 0
      %447 = vmatpush1.bf16.msra.mxu0 0
      %448 = vmatprep.subr.bf16.mxu0 0
      %449 = vmatpush1.bf16.msra.mxu0 0
      %450 = vmatprep.subr.bf16.mxu0 0
      %451 = vmatpush1.bf16.msra.mxu0 0
      %452 = vmatprep.subr.bf16.mxu0 0
      %453 = vmatpush1.bf16.msra.mxu0 0
      %454 = vmatprep.subr.bf16.mxu0 0
      %455 = vmatpush1.bf16.msra.mxu0 0
      %456 = vmatprep.subr.bf16.mxu0 0
      %457 = vmatpush1.bf16.msra.mxu0 0
      %458 = vmatprep.subr.bf16.mxu0 0
      %459 = vmatpush1.bf16.msra.mxu0 0
      %460 = vmatprep.mubr.bf16.mxu0 0
      %461 = vmatmul.mubr.bf16.gmra.mrb[0].mxu0 %v377
      %v462 = vpop.f32.mrb[0].mxu0
      %v463 = vadd.f32 0.0, %v462
      %v464 = vpop.f32.mrb[0].mxu0
      %v465 = vpop.f32.mrb[0].mxu0
      %v466 = vadd.f32 0.0, %v465
      %v467 = vpop.f32.mrb[0].mxu0
      %468 = vmatprep.mubr.bf16.mxu0 0
      %469 = vmatmul.mubr.bf16.gmra.mrb[0].mxu0 %v380
      %v470 = vpop.f32.mrb[0].mxu0
      %v471 = vadd.f32 0.0, %v470
      %v472 = vpop.f32.mrb[0].mxu0
      %v473 = vpop.f32.mrb[0].mxu0
      %v474 = vadd.f32 0.0, %v473
      %v475 = vpop.f32.mrb[0].mxu0
      %476 = vmatprep.mubr.bf16.mxu0 0
      %477 = vmatmul.mubr.bf16.gmra.mrb[0].mxu0 %v383
      %v478 = vpop.f32.mrb[0].mxu0
      %v479 = vadd.f32 0.0, %v478
      %v480 = vpop.f32.mrb[0].mxu0
      %v481 = vpop.f32.mrb[0].mxu0
      %v482 = vadd.f32 0.0, %v481
      %v483 = vpop.f32.mrb[0].mxu0
      %484 = vmatprep.mubr.bf16.mxu0 0
      %485 = vmatmul.mubr.bf16.gmra.mrb[0].mxu0 %v386
      %v486 = vpop.f32.mrb[0].mxu0
      %v487 = vadd.f32 0.0, %v486
      %v488 = vpop.f32.mrb[0].mxu0
      %v489 = vpop.f32.mrb[0].mxu0
      %v490 = vadd.f32 0.0, %v489
      %v491 = vpop.f32.mrb[0].mxu0
      %492 = vmatprep.mubr.bf16.mxu0 0
      %493 = vmatmul.mubr.bf16.gmra.mrb[0].mxu0 %v389
      %v494 = vpop.f32.mrb[0].mxu0
      %v495 = vadd.f32 0.0, %v494
      %v496 = vpop.f32.mrb[0].mxu0
      %v497 = vpop.f32.mrb[0].mxu0
      %v498 = vadd.f32 0.0, %v497
      %v499 = vpop.f32.mrb[0].mxu0
      %500 = vmatprep.mubr.bf16.mxu0 0
      %501 = vmatmul.mubr.bf16.gmra.mrb[0].mxu0 %v392
      %v502 = vpop.f32.mrb[0].mxu0
      %v503 = vadd.f32 0.0, %v502
      %v504 = vpop.f32.mrb[0].mxu0
      %v505 = vpop.f32.mrb[0].mxu0
      %v506 = vadd.f32 0.0, %v505
      %v507 = vpop.f32.mrb[0].mxu0
      %508 = vmatprep.mubr.bf16.mxu0 0
      %509 = vmatmul.mubr.bf16.gmra.mrb[0].mxu0 %v395
      %v510 = vpop.f32.mrb[0].mxu0
      %v511 = vadd.f32 0.0, %v510
      %v512 = vpop.f32.mrb[0].mxu0
      %v513 = vpop.f32.mrb[0].mxu0
      %v514 = vadd.f32 0.0, %v513
      %v515 = vpop.f32.mrb[0].mxu0
      %516 = vmatprep.mubr.bf16.mxu0 0
      %517 = vmatmul.mubr.bf16.gmra.mrb[0].mxu0 %v398
      %v518 = vpop.f32.mrb[0].mxu0
      %v519 = vadd.f32 0.0, %v518
      %v520 = vpop.f32.mrb[0].mxu0
      %v521 = vpop.f32.mrb[0].mxu0
      %v522 = vadd.f32 0.0, %v521
      %v523 = vpop.f32.mrb[0].mxu0
      %524 = vmatprep.mubr.bf16.mxu0 0
      %525 = vmatmul.mubr.bf16.gmra.mrb[0].mxu0 %v401
      %v526 = vpop.f32.mrb[0].mxu0
      %v527 = vadd.f32 0.0, %v526
      %v528 = vpop.f32.mrb[0].mxu0
      %v529 = vpop.f32.mrb[0].mxu0
      %v530 = vadd.f32 0.0, %v529
      %v531 = vpop.f32.mrb[0].mxu0
      %532 = vmatprep.mubr.bf16.mxu0 0
      %533 = vmatmul.mubr.bf16.gmra.mrb[0].mxu0 %v404
      %v534 = vpop.f32.mrb[0].mxu0
      %v535 = vadd.f32 0.0, %v534
      %v536 = vpop.f32.mrb[0].mxu0
      %v537 = vpop.f32.mrb[0].mxu0
      %v538 = vadd.f32 0.0, %v537
      %v539 = vpop.f32.mrb[0].mxu0
      %540 = vmatprep.mubr.bf16.mxu0 0
      %541 = vmatmul.mubr.bf16.gmra.mrb[0].mxu0 %v407
      %v542 = vpop.f32.mrb[0].mxu0
      %v543 = vadd.f32 0.0, %v542
      %v544 = vpop.f32.mrb[0].mxu0
      %v545 = vpop.f32.mrb[0].mxu0
      %v546 = vadd.f32 0.0, %v545
      %v547 = vpop.f32.mrb[0].mxu0
      %548 = vmatprep.mubr.bf16.mxu0 0
      %549 = vmatmul.mubr.bf16.gmra.mrb[0].mxu0 %v410
      %v550 = vpop.f32.mrb[0].mxu0
      %v551 = vadd.f32 0.0, %v550
      %v552 = vpop.f32.mrb[0].mxu0
      %v553 = vpop.f32.mrb[0].mxu0
      %v554 = vadd.f32 0.0, %v553
      %v555 = vpop.f32.mrb[0].mxu0
      %556 = vmatprep.mubr.bf16.mxu0 0
      %557 = vmatmul.mubr.bf16.gmra.mrb[0].mxu0 %v413
      %v558 = vpop.f32.mrb[0].mxu0
      %v559 = vadd.f32 0.0, %v558
      %v560 = vpop.f32.mrb[0].mxu0
      %v561 = vpop.f32.mrb[0].mxu0
      %v562 = vadd.f32 0.0, %v561
      %v563 = vpop.f32.mrb[0].mxu0
      %564 = vmatprep.mubr.bf16.mxu0 0
      %565 = vmatmul.mubr.bf16.gmra.mrb[0].mxu0 %v416
      %v566 = vpop.f32.mrb[0].mxu0
      %v567 = vadd.f32 0.0, %v566
      %v568 = vpop.f32.mrb[0].mxu0
      %v569 = vpop.f32.mrb[0].mxu0
      %v570 = vadd.f32 0.0, %v569
      %v571 = vpop.f32.mrb[0].mxu0
      %572 = vmatprep.mubr.bf16.mxu0 0
      %573 = vmatmul.mubr.bf16.gmra.mrb[0].mxu0 %v419
      %v574 = vpop.f32.mrb[0].mxu0
      %v575 = vadd.f32 0.0, %v574
      %v576 = vpop.f32.mrb[0].mxu0
      %v577 = vpop.f32.mrb[0].mxu0
      %v578 = vadd.f32 0.0, %v577
      %v579 = vpop.f32.mrb[0].mxu0
      %580 = vmatprep.mubr.bf16.mxu0 0
      %581 = vmatmul.mubr.bf16.gmra.mrb[0].mxu0 %v422
      %v582 = vpop.f32.mrb[0].mxu0
      %v583 = vadd.f32 0.0, %v582
      %v584 = vpop.f32.mrb[0].mxu0
      %v585 = vpop.f32.mrb[0].mxu0
      %v586 = vadd.f32 0.0, %v585
      %v587 = vpop.f32.mrb[0].mxu0
      %588 = vdwg.mxu0
      %v589 = vld [vmem:[%s220] sm:$0xf]
      %v590 = vld [vmem:[%s220 + $0x4] sm:$0xf]
      %v591 = vld [vmem:[%s220 + $0x8] sm:$0xf]
      %v592 = vld [vmem:[%s220 + $0xc] sm:$0xf]
      %v593 = vld [vmem:[%s220 + $0x10] sm:$0xf]
      %v594 = vld [vmem:[%s220 + $0x14] sm:$0xf]
      %v595 = vld [vmem:[%s220 + $0x18] sm:$0xf]
      %v596 = vld [vmem:[%s220 + $0x1c] sm:$0xf]
      %v597 = vld [vmem:[%s220 + $0x20] sm:$0xf]
      %v598 = vld [vmem:[%s220 + $0x24] sm:$0xf]
      %v599 = vld [vmem:[%s220 + $0x28] sm:$0xf]
      %v600 = vld [vmem:[%s220 + $0x2c] sm:$0xf]
      %v601 = vld [vmem:[%s220 + $0x30] sm:$0xf]
      %v602 = vld [vmem:[%s220 + $0x34] sm:$0xf]
      %v603 = vld [vmem:[%s220 + $0x38] sm:$0xf]
      %v604 = vld [vmem:[%s220 + $0x3c] sm:$0xf]
      %v605 = vld [vmem:[%s220 + $0x40] sm:$0xf]
      %v606 = vld [vmem:[%s220 + $0x44] sm:$0xf]
      %v607 = vld [vmem:[%s220 + $0x48] sm:$0xf]
      %v608 = vld [vmem:[%s220 + $0x4c] sm:$0xf]
      %v609 = vld [vmem:[%s220 + $0x50] sm:$0xf]
      %v610 = vld [vmem:[%s220 + $0x54] sm:$0xf]
      %v611 = vld [vmem:[%s220 + $0x58] sm:$0xf]
      %v612 = vld [vmem:[%s220 + $0x5c] sm:$0xf]
      %v613 = vld [vmem:[%s220 + $0x60] sm:$0xf]
      %v614 = vld [vmem:[%s220 + $0x64] sm:$0xf]
      %v615 = vld [vmem:[%s220 + $0x68] sm:$0xf]
      %v616 = vld [vmem:[%s220 + $0x6c] sm:$0xf]
      %v617 = vld [vmem:[%s220 + $0x70] sm:$0xf]
      %v618 = vld [vmem:[%s220 + $0x74] sm:$0xf]
      %v619 = vld [vmem:[%s220 + $0x78] sm:$0xf]
      %v620 = vld [vmem:[%s220 + $0x7c] sm:$0xf]
      %v621 = vunpack.c.l.bf16 %v589
      %v622 = vunpack.c.l.bf16 %v590
      %v623 = vunpack.c.l.bf16 %v591
      %v624 = vunpack.c.l.bf16 %v592
      %v625 = vunpack.c.l.bf16 %v593
      %v626 = vunpack.c.l.bf16 %v594
      %v627 = vunpack.c.l.bf16 %v595
      %v628 = vunpack.c.l.bf16 %v596
      %v629 = vunpack.c.l.bf16 %v597
      %v630 = vunpack.c.l.bf16 %v598
      %v631 = vunpack.c.l.bf16 %v599
      %v632 = vunpack.c.l.bf16 %v600
      %v633 = vunpack.c.l.bf16 %v601
      %v634 = vunpack.c.l.bf16 %v602
      %v635 = vunpack.c.l.bf16 %v603
      %v636 = vunpack.c.l.bf16 %v604
      %v637 = vunpack.c.l.bf16 %v605
      %v638 = vunpack.c.l.bf16 %v606
      %v639 = vunpack.c.l.bf16 %v607
      %v640 = vunpack.c.l.bf16 %v608
      %v641 = vunpack.c.l.bf16 %v609
      %v642 = vunpack.c.l.bf16 %v610
      %v643 = vunpack.c.l.bf16 %v611
      %v644 = vunpack.c.l.bf16 %v612
      %v645 = vunpack.c.l.bf16 %v613
      %v646 = vunpack.c.l.bf16 %v614
      %v647 = vunpack.c.l.bf16 %v615
      %v648 = vunpack.c.l.bf16 %v616
      %v649 = vunpack.c.l.bf16 %v617
      %v650 = vunpack.c.l.bf16 %v618
      %v651 = vunpack.c.l.bf16 %v619
      %v652 = vunpack.c.l.bf16 %v620
      %v653 = vmul.f32 %v621, %v463
      %v654 = vmul.f32 %v622, %v466
      %v655 = vmul.f32 %v623, %v471
      %v656 = vmul.f32 %v624, %v474
      %v657 = vmul.f32 %v625, %v479
      %v658 = vmul.f32 %v626, %v482
      %v659 = vmul.f32 %v627, %v487
      %v660 = vmul.f32 %v628, %v490
      %v661 = vmul.f32 %v629, %v495
      %v662 = vmul.f32 %v630, %v498
      %v663 = vmul.f32 %v631, %v503
      %v664 = vmul.f32 %v632, %v506
      %v665 = vmul.f32 %v633, %v511
      %v666 = vmul.f32 %v634, %v514
      %v667 = vmul.f32 %v635, %v519
      %v668 = vmul.f32 %v636, %v522
      %v669 = vmul.f32 %v637, %v527
      %v670 = vmul.f32 %v638, %v530
      %v671 = vmul.f32 %v639, %v535
      %v672 = vmul.f32 %v640, %v538
      %v673 = vmul.f32 %v641, %v543
      %v674 = vmul.f32 %v642, %v546
      %v675 = vmul.f32 %v643, %v551
      %v676 = vmul.f32 %v644, %v554
      %v677 = vmul.f32 %v645, %v559
      %v678 = vmul.f32 %v646, %v562
      %v679 = vmul.f32 %v647, %v567
      %v680 = vmul.f32 %v648, %v570
      %v681 = vmul.f32 %v649, %v575
      %v682 = vmul.f32 %v650, %v578
      %v683 = vmul.f32 %v651, %v583
      %v684 = vmul.f32 %v652, %v586
      %v685 = vld [vmem:[%s176] sm:$0x3]
      %s686 = smul.u32 0, 128
      %v687 = vstv %s686
      %v688 = vsub.s32 %v685, %v687
      %v689 = vlaneseq
      %v690 = vshrl.u32 %v689, 7
      %v691 = vadd.s32 %v690, 8
      %v692 = vadd.s32 %v690, 16
      %v693 = vadd.s32 %v690, 24
      %v694 = vadd.s32 %v690, 32
      %v695 = vadd.s32 %v690, 40
      %v696 = vadd.s32 %v690, 48
      %v697 = vadd.s32 %v690, 56
      %v698 = vadd.s32 %v690, 64
      %v699 = vadd.s32 %v690, 72
      %v700 = vadd.s32 %v690, 80
      %v701 = vadd.s32 %v690, 88
      %v702 = vadd.s32 %v690, 96
      %v703 = vadd.s32 %v690, 104
      %v704 = vadd.s32 %v690, 112
      %v705 = vadd.s32 %v690, 120
      %v706 = vlaneseq
      %v707 = vshrl.u32 %v706, 7
      %v708 = vsub.s32 0, %v707
      %v709 = vrot.slane %v688, %v708
      %v710 = vlaneseq
      %v711 = vshrl.u32 %v710, 7
      %v712 = vsub.s32 1, %v711
      %v713 = vrot.slane %v688, %v712
      %vm714 = vcmp.eq.s32.totalorder %v690, %v709
      %vm715 = vcmp.eq.s32.totalorder %v690, %v713
      %vm716 = vcmp.eq.s32.totalorder %v691, %v709
      %vm717 = vcmp.eq.s32.totalorder %v691, %v713
      %vm718 = vcmp.eq.s32.totalorder %v692, %v709
      %vm719 = vcmp.eq.s32.totalorder %v692, %v713
      %vm720 = vcmp.eq.s32.totalorder %v693, %v709
      %vm721 = vcmp.eq.s32.totalorder %v693, %v713
      %vm722 = vcmp.eq.s32.totalorder %v694, %v709
      %vm723 = vcmp.eq.s32.totalorder %v694, %v713
      %vm724 = vcmp.eq.s32.totalorder %v695, %v709
      %vm725 = vcmp.eq.s32.totalorder %v695, %v713
      %vm726 = vcmp.eq.s32.totalorder %v696, %v709
      %vm727 = vcmp.eq.s32.totalorder %v696, %v713
      %vm728 = vcmp.eq.s32.totalorder %v697, %v709
      %vm729 = vcmp.eq.s32.totalorder %v697, %v713
      %vm730 = vcmp.eq.s32.totalorder %v698, %v709
      %vm731 = vcmp.eq.s32.totalorder %v698, %v713
      %vm732 = vcmp.eq.s32.totalorder %v699, %v709
      %vm733 = vcmp.eq.s32.totalorder %v699, %v713
      %vm734 = vcmp.eq.s32.totalorder %v700, %v709
      %vm735 = vcmp.eq.s32.totalorder %v700, %v713
      %vm736 = vcmp.eq.s32.totalorder %v701, %v709
      %vm737 = vcmp.eq.s32.totalorder %v701, %v713
      %vm738 = vcmp.eq.s32.totalorder %v702, %v709
      %vm739 = vcmp.eq.s32.totalorder %v702, %v713
      %vm740 = vcmp.eq.s32.totalorder %v703, %v709
      %vm741 = vcmp.eq.s32.totalorder %v703, %v713
      %vm742 = vcmp.eq.s32.totalorder %v704, %v709
      %vm743 = vcmp.eq.s32.totalorder %v704, %v713
      %vm744 = vcmp.eq.s32.totalorder %v705, %v709
      %vm745 = vcmp.eq.s32.totalorder %v705, %v713
      %v746 = vsel %vm714, 1, 0
      %v747 = vsel %vm715, 1, 0
      %v748 = vsel %vm716, 1, 0
      %v749 = vsel %vm717, 1, 0
      %v750 = vsel %vm718, 1, 0
      %v751 = vsel %vm719, 1, 0
      %v752 = vsel %vm720, 1, 0
      %v753 = vsel %vm721, 1, 0
      %v754 = vsel %vm722, 1, 0
      %v755 = vsel %vm723, 1, 0
      %v756 = vsel %vm724, 1, 0
      %v757 = vsel %vm725, 1, 0
      %v758 = vsel %vm726, 1, 0
      %v759 = vsel %vm727, 1, 0
      %v760 = vsel %vm728, 1, 0
      %v761 = vsel %vm729, 1, 0
      %v762 = vsel %vm730, 1, 0
      %v763 = vsel %vm731, 1, 0
      %v764 = vsel %vm732, 1, 0
      %v765 = vsel %vm733, 1, 0
      %v766 = vsel %vm734, 1, 0
      %v767 = vsel %vm735, 1, 0
      %v768 = vsel %vm736, 1, 0
      %v769 = vsel %vm737, 1, 0
      %v770 = vsel %vm738, 1, 0
      %v771 = vsel %vm739, 1, 0
      %v772 = vsel %vm740, 1, 0
      %v773 = vsel %vm741, 1, 0
      %v774 = vsel %vm742, 1, 0
      %v775 = vsel %vm743, 1, 0
      %v776 = vsel %vm744, 1, 0
      %v777 = vsel %vm745, 1, 0
      %v778 = vcvt.s32.f32 %v746
      %v779 = vcvt.s32.f32 %v747
      %v780 = vcvt.s32.f32 %v748
      %v781 = vcvt.s32.f32 %v749
      %v782 = vcvt.s32.f32 %v750
      %v783 = vcvt.s32.f32 %v751
      %v784 = vcvt.s32.f32 %v752
      %v785 = vcvt.s32.f32 %v753
      %v786 = vcvt.s32.f32 %v754
      %v787 = vcvt.s32.f32 %v755
      %v788 = vcvt.s32.f32 %v756
      %v789 = vcvt.s32.f32 %v757
      %v790 = vcvt.s32.f32 %v758
      %v791 = vcvt.s32.f32 %v759
      %v792 = vcvt.s32.f32 %v760
      %v793 = vcvt.s32.f32 %v761
      %v794 = vcvt.s32.f32 %v762
      %v795 = vcvt.s32.f32 %v763
      %v796 = vcvt.s32.f32 %v764
      %v797 = vcvt.s32.f32 %v765
      %v798 = vcvt.s32.f32 %v766
      %v799 = vcvt.s32.f32 %v767
      %v800 = vcvt.s32.f32 %v768
      %v801 = vcvt.s32.f32 %v769
      %v802 = vcvt.s32.f32 %v770
      %v803 = vcvt.s32.f32 %v771
      %v804 = vcvt.s32.f32 %v772
      %v805 = vcvt.s32.f32 %v773
      %v806 = vcvt.s32.f32 %v774
      %v807 = vcvt.s32.f32 %v775
      %v808 = vcvt.s32.f32 %v776
      %v809 = vcvt.s32.f32 %v777
      %v810 = vpack.c.bf16 %v780, %v778
      %v811 = vpack.c.bf16 %v781, %v779
      %v812 = vpack.c.bf16 %v784, %v782
      %v813 = vpack.c.bf16 %v785, %v783
      %v814 = vpack.c.bf16 %v788, %v786
      %v815 = vpack.c.bf16 %v789, %v787
      %v816 = vpack.c.bf16 %v792, %v790
      %v817 = vpack.c.bf16 %v793, %v791
      %v818 = vpack.c.bf16 %v796, %v794
      %v819 = vpack.c.bf16 %v797, %v795
      %v820 = vpack.c.bf16 %v800, %v798
      %v821 = vpack.c.bf16 %v801, %v799
      %v822 = vpack.c.bf16 %v804, %v802
      %v823 = vpack.c.bf16 %v805, %v803
      %v824 = vpack.c.bf16 %v808, %v806
      %v825 = vpack.c.bf16 %v809, %v807
      %v826 = vld [vmem:[#allocation2] sm:$0xff]
      %v827 = vld [vmem:[#allocation2 + $0x8] sm:$0xff]
      %v828 = vld [vmem:[#allocation2 + $0x10] sm:$0xff]
      %v829 = vld [vmem:[#allocation2 + $0x18] sm:$0xff]
      %v830 = vld [vmem:[#allocation2 + $0x20] sm:$0xff]
      %v831 = vld [vmem:[#allocation2 + $0x28] sm:$0xff]
      %v832 = vld [vmem:[#allocation2 + $0x30] sm:$0xff]
      %v833 = vld [vmem:[#allocation2 + $0x38] sm:$0xff]
      %v834 = vld [vmem:[#allocation2 + $0x40] sm:$0xff]
      %v835 = vld [vmem:[#allocation2 + $0x48] sm:$0xff]
      %v836 = vld [vmem:[#allocation2 + $0x50] sm:$0xff]
      %v837 = vld [vmem:[#allocation2 + $0x58] sm:$0xff]
      %v838 = vld [vmem:[#allocation2 + $0x60] sm:$0xff]
      %v839 = vld [vmem:[#allocation2 + $0x68] sm:$0xff]
      %v840 = vld [vmem:[#allocation2 + $0x70] sm:$0xff]
      %v841 = vld [vmem:[#allocation2 + $0x78] sm:$0xff]
      %v842 = vpack.c.bf16 %v654, %v653
      %v843 = vpack.c.bf16 %v656, %v655
      %v844 = vpack.c.bf16 %v658, %v657
      %v845 = vpack.c.bf16 %v660, %v659
      %v846 = vpack.c.bf16 %v662, %v661
      %v847 = vpack.c.bf16 %v664, %v663
      %v848 = vpack.c.bf16 %v666, %v665
      %v849 = vpack.c.bf16 %v668, %v667
      %v850 = vpack.c.bf16 %v670, %v669
      %v851 = vpack.c.bf16 %v672, %v671
      %v852 = vpack.c.bf16 %v674, %v673
      %v853 = vpack.c.bf16 %v676, %v675
      %v854 = vpack.c.bf16 %v678, %v677
      %v855 = vpack.c.bf16 %v680, %v679
      %v856 = vpack.c.bf16 %v682, %v681
      %v857 = vpack.c.bf16 %v684, %v683
      %858 = vmatprep.subr.bf16.mxu0 0
      %859 = vmatpush1.bf16.msra.mxu0 %v842
      %860 = vmatprep.subr.bf16.mxu0 0
      %861 = vmatpush1.bf16.msra.mxu0 %v843
      %862 = vmatprep.subr.bf16.mxu0 0
      %863 = vmatpush1.bf16.msra.mxu0 %v844
      %864 = vmatprep.subr.bf16.mxu0 0
      %865 = vmatpush1.bf16.msra.mxu0 %v845
      %866 = vmatprep.subr.bf16.mxu0 0
      %867 = vmatpush1.bf16.msra.mxu0 %v846
      %868 = vmatprep.subr.bf16.mxu0 0
      %869 = vmatpush1.bf16.msra.mxu0 %v847
      %870 = vmatprep.subr.bf16.mxu0 0
      %871 = vmatpush1.bf16.msra.mxu0 %v848
      %872 = vmatprep.subr.bf16.mxu0 0
      %873 = vmatpush1.bf16.msra.mxu0 %v849
      %874 = vmatprep.subr.bf16.mxu0 0
      %875 = vmatpush1.bf16.msra.mxu0 %v850
      %876 = vmatprep.subr.bf16.mxu0 0
      %877 = vmatpush1.bf16.msra.mxu0 %v851
      %878 = vmatprep.subr.bf16.mxu0 0
      %879 = vmatpush1.bf16.msra.mxu0 %v852
      %880 = vmatprep.subr.bf16.mxu0 0
      %881 = vmatpush1.bf16.msra.mxu0 %v853
      %882 = vmatprep.subr.bf16.mxu0 0
      %883 = vmatpush1.bf16.msra.mxu0 %v854
      %884 = vmatprep.subr.bf16.mxu0 0
      %885 = vmatpush1.bf16.msra.mxu0 %v855
      %886 = vmatprep.subr.bf16.mxu0 0
      %887 = vmatpush1.bf16.msra.mxu0 %v856
      %888 = vmatprep.subr.bf16.mxu0 0
      %889 = vmatpush1.bf16.msra.mxu0 %v857
      %890 = vmatprep.mubr.bf16.mxu0 %v811
      %891 = vmatmul.mubr.bf16.gmra.mrb[0].mxu0 %v810
      %v892 = vpop.f32.mrb[0].mxu0
      %v893 = vadd.f32 0.0, %v892
      %v894 = vpop.f32.mrb[0].mxu0
      %v895 = vpop.f32.mrb[0].mxu0
      %v896 = vadd.f32 0.0, %v895
      %v897 = vpop.f32.mrb[0].mxu0
      %898 = vmatprep.mubr.bf16.mxu0 %v813
      %899 = vmatmul.mubr.bf16.gmra.mrb[0].mxu0 %v812
      %v900 = vpop.f32.mrb[0].mxu0
      %v901 = vadd.f32 0.0, %v900
      %v902 = vpop.f32.mrb[0].mxu0
      %v903 = vpop.f32.mrb[0].mxu0
      %v904 = vadd.f32 0.0, %v903
      %v905 = vpop.f32.mrb[0].mxu0
      %906 = vmatprep.mubr.bf16.mxu0 %v815
      %907 = vmatmul.mubr.bf16.gmra.mrb[0].mxu0 %v814
      %v908 = vpop.f32.mrb[0].mxu0
      %v909 = vadd.f32 0.0, %v908
      %v910 = vpop.f32.mrb[0].mxu0
      %v911 = vpop.f32.mrb[0].mxu0
      %v912 = vadd.f32 0.0, %v911
      %v913 = vpop.f32.mrb[0].mxu0
      %914 = vmatprep.mubr.bf16.mxu0 %v817
      %915 = vmatmul.mubr.bf16.gmra.mrb[0].mxu0 %v816
      %v916 = vpop.f32.mrb[0].mxu0
      %v917 = vadd.f32 0.0, %v916
      %v918 = vpop.f32.mrb[0].mxu0
      %v919 = vpop.f32.mrb[0].mxu0
      %v920 = vadd.f32 0.0, %v919
      %v921 = vpop.f32.mrb[0].mxu0
      %922 = vmatprep.mubr.bf16.mxu0 %v819
      %923 = vmatmul.mubr.bf16.gmra.mrb[0].mxu0 %v818
      %v924 = vpop.f32.mrb[0].mxu0
      %v925 = vadd.f32 0.0, %v924
      %v926 = vpop.f32.mrb[0].mxu0
      %v927 = vpop.f32.mrb[0].mxu0
      %v928 = vadd.f32 0.0, %v927
      %v929 = vpop.f32.mrb[0].mxu0
      %930 = vmatprep.mubr.bf16.mxu0 %v821
      %931 = vmatmul.mubr.bf16.gmra.mrb[0].mxu0 %v820
      %v932 = vpop.f32.mrb[0].mxu0
      %v933 = vadd.f32 0.0, %v932
      %v934 = vpop.f32.mrb[0].mxu0
      %v935 = vpop.f32.mrb[0].mxu0
      %v936 = vadd.f32 0.0, %v935
      %v937 = vpop.f32.mrb[0].mxu0
      %938 = vmatprep.mubr.bf16.mxu0 %v823
      %939 = vmatmul.mubr.bf16.gmra.mrb[0].mxu0 %v822
      %v940 = vpop.f32.mrb[0].mxu0
      %v941 = vadd.f32 0.0, %v940
      %v942 = vpop.f32.mrb[0].mxu0
      %v943 = vpop.f32.mrb[0].mxu0
      %v944 = vadd.f32 0.0, %v943
      %v945 = vpop.f32.mrb[0].mxu0
      %946 = vmatprep.mubr.bf16.mxu0 %v825
      %947 = vmatmul.mubr.bf16.gmra.mrb[0].mxu0 %v824
      %v948 = vpop.f32.mrb[0].mxu0
      %v949 = vadd.f32 0.0, %v948
      %v950 = vpop.f32.mrb[0].mxu0
      %v951 = vpop.f32.mrb[0].mxu0
      %v952 = vadd.f32 0.0, %v951
      %v953 = vpop.f32.mrb[0].mxu0
      %954 = vdwg.mxu0
      %v955 = vadd.f32 %v826, %v893
      %v956 = vadd.f32 %v827, %v896
      %v957 = vadd.f32 %v828, %v901
      %v958 = vadd.f32 %v829, %v904
      %v959 = vadd.f32 %v830, %v909
      %v960 = vadd.f32 %v831, %v912
      %v961 = vadd.f32 %v832, %v917
      %v962 = vadd.f32 %v833, %v920
      %v963 = vadd.f32 %v834, %v925
      %v964 = vadd.f32 %v835, %v928
      %v965 = vadd.f32 %v836, %v933
      %v966 = vadd.f32 %v837, %v936
      %v967 = vadd.f32 %v838, %v941
      %v968 = vadd.f32 %v839, %v944
      %v969 = vadd.f32 %v840, %v949
      %v970 = vadd.f32 %v841, %v952
      %971 = vst [vmem:[#allocation2] sm:$0xff] %v955
      %972 = vst [vmem:[#allocation2 + $0x8] sm:$0xff] %v956
      %973 = vst [vmem:[#allocation2 + $0x10] sm:$0xff] %v957
      %974 = vst [vmem:[#allocation2 + $0x18] sm:$0xff] %v958
      %975 = vst [vmem:[#allocation2 + $0x20] sm:$0xff] %v959
      %976 = vst [vmem:[#allocation2 + $0x28] sm:$0xff] %v960
      %977 = vst [vmem:[#allocation2 + $0x30] sm:$0xff] %v961
      %978 = vst [vmem:[#allocation2 + $0x38] sm:$0xff] %v962
      %979 = vst [vmem:[#allocation2 + $0x40] sm:$0xff] %v963
      %980 = vst [vmem:[#allocation2 + $0x48] sm:$0xff] %v964
      %981 = vst [vmem:[#allocation2 + $0x50] sm:$0xff] %v965
      %982 = vst [vmem:[#allocation2 + $0x58] sm:$0xff] %v966
      %983 = vst [vmem:[#allocation2 + $0x60] sm:$0xff] %v967
      %984 = vst [vmem:[#allocation2 + $0x68] sm:$0xff] %v968
      %985 = vst [vmem:[#allocation2 + $0x70] sm:$0xff] %v969
      %986 = vst [vmem:[#allocation2 + $0x78] sm:$0xff] %v970
    $region53: #{tpu_custom_call.1} parent=1 // pred_fallthru
      _
    // Predicated region
    $region54: #{tpu_custom_call.1} parent=1 // pred_check
      %p987 = pneg %p232
    $region55: #{tpu_custom_call.1} parent=1 // pred_check_branch
      %989 = sbr.rel (%p987) target = $region57
    $region56: #{tpu_custom_call.1} parent=1 // pred_region
      %v990 = vld [vmem:[#allocation2] sm:$0xff]
      %v991 = vld [vmem:[#allocation2 + $0x8] sm:$0xff]
      %v992 = vld [vmem:[#allocation2 + $0x10] sm:$0xff]
      %v993 = vld [vmem:[#allocation2 + $0x18] sm:$0xff]
      %v994 = vld [vmem:[#allocation2 + $0x20] sm:$0xff]
      %v995 = vld [vmem:[#allocation2 + $0x28] sm:$0xff]
      %v996 = vld [vmem:[#allocation2 + $0x30] sm:$0xff]
      %v997 = vld [vmem:[#allocation2 + $0x38] sm:$0xff]
      %v998 = vld [vmem:[#allocation2 + $0x40] sm:$0xff]
      %v999 = vld [vmem:[#allocation2 + $0x48] sm:$0xff]
      %v1000 = vld [vmem:[#allocation2 + $0x50] sm:$0xff]
      %v1001 = vld [vmem:[#allocation2 + $0x58] sm:$0xff]
      %v1002 = vld [vmem:[#allocation2 + $0x60] sm:$0xff]
      %v1003 = vld [vmem:[#allocation2 + $0x68] sm:$0xff]
      %v1004 = vld [vmem:[#allocation2 + $0x70] sm:$0xff]
      %v1005 = vld [vmem:[#allocation2 + $0x78] sm:$0xff]
      %v1006 = vpack.c.bf16 %v991, %v990
      %v1007 = vpack.c.bf16 %v993, %v992
      %v1008 = vpack.c.bf16 %v995, %v994
      %v1009 = vpack.c.bf16 %v997, %v996
      %v1010 = vpack.c.bf16 %v999, %v998
      %v1011 = vpack.c.bf16 %v1001, %v1000
      %v1012 = vpack.c.bf16 %v1003, %v1002
      %v1013 = vpack.c.bf16 %v1005, %v1004
      %v1014 = vld [vmem:[#allocation7] sm:$0xf]
      %v1015 = vld [vmem:[#allocation7 + $0x4] sm:$0xf]
      %v1016 = vld [vmem:[#allocation7 + $0x8] sm:$0xf]
      %v1017 = vld [vmem:[#allocation7 + $0xc] sm:$0xf]
      %v1018 = vld [vmem:[#allocation7 + $0x10] sm:$0xf]
      %v1019 = vld [vmem:[#allocation7 + $0x14] sm:$0xf]
      %v1020 = vld [vmem:[#allocation7 + $0x18] sm:$0xf]
      %v1021 = vld [vmem:[#allocation7 + $0x1c] sm:$0xf]
      %v1022 = vld [vmem:[#allocation7 + $0x20] sm:$0xf]
      %v1023 = vld [vmem:[#allocation7 + $0x24] sm:$0xf]
      %v1024 = vld [vmem:[#allocation7 + $0x28] sm:$0xf]
      %v1025 = vld [vmem:[#allocation7 + $0x2c] sm:$0xf]
      %v1026 = vld [vmem:[#allocation7 + $0x30] sm:$0xf]
      %v1027 = vld [vmem:[#allocation7 + $0x34] sm:$0xf]
      %v1028 = vld [vmem:[#allocation7 + $0x38] sm:$0xf]
      %v1029 = vld [vmem:[#allocation7 + $0x3c] sm:$0xf]
      %v1030 = vld [vmem:[%s8] sm:$0x1]
      %v1031 = vlaneseq
      %v1032 = vshrl.u32 %v1031, 7
      %v1033 = vsub.s32 0, %v1032
      %v1034 = vrot.slane %v1030, %v1033
      %v1051 = vunpack.c.l.b16 %v1014
      %v1052 = vunpack.c.l.b16 %v1015
      %v1053 = vunpack.c.l.b16 %v1016
      %v1054 = vunpack.c.l.b16 %v1017
      %v1055 = vunpack.c.l.b16 %v1018
      %v1056 = vunpack.c.l.b16 %v1019
      %v1057 = vunpack.c.l.b16 %v1020
      %v1058 = vunpack.c.l.b16 %v1021
      %v1059 = vunpack.c.l.b16 %v1022
      %v1060 = vunpack.c.l.b16 %v1023
      %v1061 = vunpack.c.l.b16 %v1024
      %v1062 = vunpack.c.l.b16 %v1025
      %v1063 = vunpack.c.l.b16 %v1026
      %v1064 = vunpack.c.l.b16 %v1027
      %v1065 = vunpack.c.l.b16 %v1028
      %v1066 = vunpack.c.l.b16 %v1029
      %v1067 = vpack.c.b16 %v1052, %v1051
      %v1068 = vpack.c.b16 %v1054, %v1053
      %v1069 = vpack.c.b16 %v1056, %v1055
      %v1070 = vpack.c.b16 %v1058, %v1057
      %v1071 = vpack.c.b16 %v1060, %v1059
      %v1072 = vpack.c.b16 %v1062, %v1061
      %v1073 = vpack.c.b16 %v1064, %v1063
      %v1074 = vpack.c.b16 %v1066, %v1065
      %1083 = vmatprep.subr.bf16.mxu0 0
      %1084 = vmatpush1.bf16.msra.mxu0 %v1067
      %1085 = vmatprep.subr.bf16.mxu0 0
      %1086 = vmatpush1.bf16.msra.mxu0 %v1068
      %1087 = vmatprep.subr.bf16.mxu0 0
      %1088 = vmatpush1.bf16.msra.mxu0 %v1069
      %1089 = vmatprep.subr.bf16.mxu0 0
      %1090 = vmatpush1.bf16.msra.mxu0 %v1070
      %1091 = vmatprep.subr.bf16.mxu0 0
      %1092 = vmatpush1.bf16.msra.mxu0 %v1071
      %1093 = vmatprep.subr.bf16.mxu0 0
      %1094 = vmatpush1.bf16.msra.mxu0 %v1072
      %1095 = vmatprep.subr.bf16.mxu0 0
      %1096 = vmatpush1.bf16.msra.mxu0 %v1073
      %1097 = vmatprep.subr.bf16.mxu0 0
      %1098 = vmatpush1.bf16.msra.mxu0 %v1074
      %1099 = vmatprep.subr.bf16.mxu0 0
      %1100 = vmatpush1.bf16.msra.mxu0 0
      %1101 = vmatprep.subr.bf16.mxu0 0
      %1102 = vmatpush1.bf16.msra.mxu0 0
      %1103 = vmatprep.subr.bf16.mxu0 0
      %1104 = vmatpush1.bf16.msra.mxu0 0
      %1105 = vmatprep.subr.bf16.mxu0 0
      %1106 = vmatpush1.bf16.msra.mxu0 0
      %1107 = vmatprep.subr.bf16.mxu0 0
      %1108 = vmatpush1.bf16.msra.mxu0 0
      %1109 = vmatprep.subr.bf16.mxu0 0
      %1110 = vmatpush1.bf16.msra.mxu0 0
      %1111 = vmatprep.subr.bf16.mxu0 0
      %1112 = vmatpush1.bf16.msra.mxu0 0
      %1113 = vmatprep.subr.bf16.mxu0 0
      %1114 = vmatpush1.bf16.msra.mxu0 0
      %1115 = vmatprep.mubr.bf16.mxu0 0
      %1116 = vmatmul.mubr.bf16.gmra.mrb[0].mxu0 %v1006
      %v1117 = vpop.f32.mrb[0].mxu0
      %v1118 = vadd.f32 %v1034, %v1117
      %v1119 = vpop.f32.mrb[0].mxu0
      %v1120 = vpop.f32.mrb[0].mxu0
      %v1121 = vadd.f32 %v1034, %v1120
      %v1122 = vpop.f32.mrb[0].mxu0
      %1123 = vmatprep.mubr.bf16.mxu0 0
      %1124 = vmatmul.mubr.bf16.gmra.mrb[0].mxu0 %v1007
      %v1125 = vpop.f32.mrb[0].mxu0
      %v1126 = vadd.f32 %v1034, %v1125
      %v1127 = vpop.f32.mrb[0].mxu0
      %v1128 = vpop.f32.mrb[0].mxu0
      %v1129 = vadd.f32 %v1034, %v1128
      %v1130 = vpop.f32.mrb[0].mxu0
      %1131 = vmatprep.mubr.bf16.mxu0 0
      %1132 = vmatmul.mubr.bf16.gmra.mrb[0].mxu0 %v1008
      %v1133 = vpop.f32.mrb[0].mxu0
      %v1134 = vadd.f32 %v1034, %v1133
      %v1135 = vpop.f32.mrb[0].mxu0
      %v1136 = vpop.f32.mrb[0].mxu0
      %v1137 = vadd.f32 %v1034, %v1136
      %v1138 = vpop.f32.mrb[0].mxu0
      %1139 = vmatprep.mubr.bf16.mxu0 0
      %1140 = vmatmul.mubr.bf16.gmra.mrb[0].mxu0 %v1009
      %v1141 = vpop.f32.mrb[0].mxu0
      %v1142 = vadd.f32 %v1034, %v1141
      %v1143 = vpop.f32.mrb[0].mxu0
      %v1144 = vpop.f32.mrb[0].mxu0
      %v1145 = vadd.f32 %v1034, %v1144
      %v1146 = vpop.f32.mrb[0].mxu0
      %1147 = vmatprep.mubr.bf16.mxu0 0
      %1148 = vmatmul.mubr.bf16.gmra.mrb[0].mxu0 %v1010
      %v1149 = vpop.f32.mrb[0].mxu0
      %v1150 = vadd.f32 %v1034, %v1149
      %v1151 = vpop.f32.mrb[0].mxu0
      %v1152 = vpop.f32.mrb[0].mxu0
      %v1153 = vadd.f32 %v1034, %v1152
      %v1154 = vpop.f32.mrb[0].mxu0
      %1155 = vmatprep.mubr.bf16.mxu0 0
      %1156 = vmatmul.mubr.bf16.gmra.mrb[0].mxu0 %v1011
      %v1157 = vpop.f32.mrb[0].mxu0
      %v1158 = vadd.f32 %v1034, %v1157
      %v1159 = vpop.f32.mrb[0].mxu0
      %v1160 = vpop.f32.mrb[0].mxu0
      %v1161 = vadd.f32 %v1034, %v1160
      %v1162 = vpop.f32.mrb[0].mxu0
      %1163 = vmatprep.mubr.bf16.mxu0 0
      %1164 = vmatmul.mubr.bf16.gmra.mrb[0].mxu0 %v1012
      %v1165 = vpop.f32.mrb[0].mxu0
      %v1166 = vadd.f32 %v1034, %v1165
      %v1167 = vpop.f32.mrb[0].mxu0
      %v1168 = vpop.f32.mrb[0].mxu0
      %v1169 = vadd.f32 %v1034, %v1168
      %v1170 = vpop.f32.mrb[0].mxu0
      %1171 = vmatprep.mubr.bf16.mxu0 0
      %1172 = vmatmul.mubr.bf16.gmra.mrb[0].mxu0 %v1013
      %v1173 = vpop.f32.mrb[0].mxu0
      %v1174 = vadd.f32 %v1034, %v1173
      %v1175 = vpop.f32.mrb[0].mxu0
      %v1176 = vpop.f32.mrb[0].mxu0
      %v1177 = vadd.f32 %v1034, %v1176
      %v1178 = vpop.f32.mrb[0].mxu0
      %1179 = vdwg.mxu0
      %v1180 = vxor.u32 %v1118, 2147483648
      %v1181 = vxor.u32 %v1121, 2147483648
      %v1182 = vxor.u32 %v1126, 2147483648
      %v1183 = vxor.u32 %v1129, 2147483648
      %v1184 = vxor.u32 %v1134, 2147483648
      %v1185 = vxor.u32 %v1137, 2147483648
      %v1186 = vxor.u32 %v1142, 2147483648
      %v1187 = vxor.u32 %v1145, 2147483648
      %v1188 = vxor.u32 %v1150, 2147483648
      %v1189 = vxor.u32 %v1153, 2147483648
      %v1190 = vxor.u32 %v1158, 2147483648
      %v1191 = vxor.u32 %v1161, 2147483648
      %v1192 = vxor.u32 %v1166, 2147483648
      %v1193 = vxor.u32 %v1169, 2147483648
      %v1194 = vxor.u32 %v1174, 2147483648
      %v1195 = vxor.u32 %v1177, 2147483648
      %v1196 = vmul.f32 %v1180, 1.442695
      %v1197 = vpow.pop %v1196
      %v1198 = vmul.f32 %v1181, 1.442695
      %v1199 = vpow.pop %v1198
      %v1200 = vmul.f32 %v1182, 1.442695
      %v1201 = vpow.pop %v1200
      %v1202 = vmul.f32 %v1183, 1.442695
      %v1203 = vpow.pop %v1202
      %v1204 = vmul.f32 %v1184, 1.442695
      %v1205 = vpow.pop %v1204
      %v1206 = vmul.f32 %v1185, 1.442695
      %v1207 = vpow.pop %v1206
      %v1208 = vmul.f32 %v1186, 1.442695
      %v1209 = vpow.pop %v1208
      %v1210 = vmul.f32 %v1187, 1.442695
      %v1211 = vpow.pop %v1210
      %v1212 = vmul.f32 %v1188, 1.442695
      %v1213 = vpow.pop %v1212
      %v1214 = vmul.f32 %v1189, 1.442695
      %v1215 = vpow.pop %v1214
      %v1216 = vmul.f32 %v1190, 1.442695
      %v1217 = vpow.pop %v1216
      %v1218 = vmul.f32 %v1191, 1.442695
      %v1219 = vpow.pop %v1218
      %v1220 = vmul.f32 %v1192, 1.442695
      %v1221 = vpow.pop %v1220
      %v1222 = vmul.f32 %v1193, 1.442695
      %v1223 = vpow.pop %v1222
      %v1224 = vmul.f32 %v1194, 1.442695
      %v1225 = vpow.pop %v1224
      %v1226 = vmul.f32 %v1195, 1.442695
      %v1227 = vpow.pop %v1226
      %v1228 = vadd.f32 %v1197, 1.0
      %v1229 = vadd.f32 %v1199, 1.0
      %v1230 = vadd.f32 %v1201, 1.0
      %v1231 = vadd.f32 %v1203, 1.0
      %v1232 = vadd.f32 %v1205, 1.0
      %v1233 = vadd.f32 %v1207, 1.0
      %v1234 = vadd.f32 %v1209, 1.0
      %v1235 = vadd.f32 %v1211, 1.0
      %v1236 = vadd.f32 %v1213, 1.0
      %v1237 = vadd.f32 %v1215, 1.0
      %v1238 = vadd.f32 %v1217, 1.0
      %v1239 = vadd.f32 %v1219, 1.0
      %v1240 = vadd.f32 %v1221, 1.0
      %v1241 = vadd.f32 %v1223, 1.0
      %v1242 = vadd.f32 %v1225, 1.0
      %v1243 = vadd.f32 %v1227, 1.0
      %v1244 = vrcp.pop %v1228
      %v1245 = vmul.f32 1.0, %v1244
      %v1246 = vrcp.pop %v1229
      %v1247 = vmul.f32 1.0, %v1246
      %v1248 = vrcp.pop %v1230
      %v1249 = vmul.f32 1.0, %v1248
      %v1250 = vrcp.pop %v1231
      %v1251 = vmul.f32 1.0, %v1250
      %v1252 = vrcp.pop %v1232
      %v1253 = vmul.f32 1.0, %v1252
      %v1254 = vrcp.pop %v1233
      %v1255 = vmul.f32 1.0, %v1254
      %v1256 = vrcp.pop %v1234
      %v1257 = vmul.f32 1.0, %v1256
      %v1258 = vrcp.pop %v1235
      %v1259 = vmul.f32 1.0, %v1258
      %v1260 = vrcp.pop %v1236
      %v1261 = vmul.f32 1.0, %v1260
      %v1262 = vrcp.pop %v1237
      %v1263 = vmul.f32 1.0, %v1262
      %v1264 = vrcp.pop %v1238
      %v1265 = vmul.f32 1.0, %v1264
      %v1266 = vrcp.pop %v1239
      %v1267 = vmul.f32 1.0, %v1266
      %v1268 = vrcp.pop %v1240
      %v1269 = vmul.f32 1.0, %v1268
      %v1270 = vrcp.pop %v1241
      %v1271 = vmul.f32 1.0, %v1270
      %v1272 = vrcp.pop %v1242
      %v1273 = vmul.f32 1.0, %v1272
      %v1274 = vrcp.pop %v1243
      %v1275 = vmul.f32 1.0, %v1274
      %v1276 = vmul.f32 %v1118, %v1245
      %v1277 = vmul.f32 %v1121, %v1247
      %v1278 = vmul.f32 %v1126, %v1249
      %v1279 = vmul.f32 %v1129, %v1251
      %v1280 = vmul.f32 %v1134, %v1253
      %v1281 = vmul.f32 %v1137, %v1255
      %v1282 = vmul.f32 %v1142, %v1257
      %v1283 = vmul.f32 %v1145, %v1259
      %v1284 = vmul.f32 %v1150, %v1261
      %v1285 = vmul.f32 %v1153, %v1263
      %v1286 = vmul.f32 %v1158, %v1265
      %v1287 = vmul.f32 %v1161, %v1267
      %v1288 = vmul.f32 %v1166, %v1269
      %v1289 = vmul.f32 %v1169, %v1271
      %v1290 = vmul.f32 %v1174, %v1273
      %v1291 = vmul.f32 %v1177, %v1275
      %v1292 = vpack.c.bf16 %v1277, %v1276
      %v1293 = vpack.c.bf16 %v1279, %v1278
      %v1294 = vpack.c.bf16 %v1281, %v1280
      %v1295 = vpack.c.bf16 %v1283, %v1282
      %v1296 = vpack.c.bf16 %v1285, %v1284
      %v1297 = vpack.c.bf16 %v1287, %v1286
      %v1298 = vpack.c.bf16 %v1289, %v1288
      %v1299 = vpack.c.bf16 %v1291, %v1290
      %s1300 = scalar_lea.vmem [#allocation7], 64
      %v1301 = vld [vmem:[%s1300] sm:$0xf]
      %v1302 = vld [vmem:[%s1300 + $0x4] sm:$0xf]
      %v1303 = vld [vmem:[%s1300 + $0x8] sm:$0xf]
      %v1304 = vld [vmem:[%s1300 + $0xc] sm:$0xf]
      %v1305 = vld [vmem:[%s1300 + $0x10] sm:$0xf]
      %v1306 = vld [vmem:[%s1300 + $0x14] sm:$0xf]
      %v1307 = vld [vmem:[%s1300 + $0x18] sm:$0xf]
      %v1308 = vld [vmem:[%s1300 + $0x1c] sm:$0xf]
      %v1309 = vld [vmem:[%s1300 + $0x20] sm:$0xf]
      %v1310 = vld [vmem:[%s1300 + $0x24] sm:$0xf]
      %v1311 = vld [vmem:[%s1300 + $0x28] sm:$0xf]
      %v1312 = vld [vmem:[%s1300 + $0x2c] sm:$0xf]
      %v1313 = vld [vmem:[%s1300 + $0x30] sm:$0xf]
      %v1314 = vld [vmem:[%s1300 + $0x34] sm:$0xf]
      %v1315 = vld [vmem:[%s1300 + $0x38] sm:$0xf]
      %v1316 = vld [vmem:[%s1300 + $0x3c] sm:$0xf]
      %v1317 = vld [vmem:[%s8 + $0x1] sm:$0x1]
      %v1318 = vlaneseq
      %v1319 = vshrl.u32 %v1318, 7
      %v1320 = vsub.s32 0, %v1319
      %v1321 = vrot.slane %v1317, %v1320
      %v1338 = vunpack.c.l.b16 %v1301
      %v1339 = vunpack.c.l.b16 %v1302
      %v1340 = vunpack.c.l.b16 %v1303
      %v1341 = vunpack.c.l.b16 %v1304
      %v1342 = vunpack.c.l.b16 %v1305
      %v1343 = vunpack.c.l.b16 %v1306
      %v1344 = vunpack.c.l.b16 %v1307
      %v1345 = vunpack.c.l.b16 %v1308
      %v1346 = vunpack.c.l.b16 %v1309
      %v1347 = vunpack.c.l.b16 %v1310
      %v1348 = vunpack.c.l.b16 %v1311
      %v1349 = vunpack.c.l.b16 %v1312
      %v1350 = vunpack.c.l.b16 %v1313
      %v1351 = vunpack.c.l.b16 %v1314
      %v1352 = vunpack.c.l.b16 %v1315
      %v1353 = vunpack.c.l.b16 %v1316
      %v1354 = vpack.c.b16 %v1339, %v1338
      %v1355 = vpack.c.b16 %v1341, %v1340
      %v1356 = vpack.c.b16 %v1343, %v1342
      %v1357 = vpack.c.b16 %v1345, %v1344
      %v1358 = vpack.c.b16 %v1347, %v1346
      %v1359 = vpack.c.b16 %v1349, %v1348
      %v1360 = vpack.c.b16 %v1351, %v1350
      %v1361 = vpack.c.b16 %v1353, %v1352
      %1370 = vmatprep.subr.bf16.mxu0 0
      %1371 = vmatpush1.bf16.msra.mxu0 %v1354
      %1372 = vmatprep.subr.bf16.mxu0 0
      %1373 = vmatpush1.bf16.msra.mxu0 %v1355
      %1374 = vmatprep.subr.bf16.mxu0 0
      %1375 = vmatpush1.bf16.msra.mxu0 %v1356
      %1376 = vmatprep.subr.bf16.mxu0 0
      %1377 = vmatpush1.bf16.msra.mxu0 %v1357
      %1378 = vmatprep.subr.bf16.mxu0 0
      %1379 = vmatpush1.bf16.msra.mxu0 %v1358
      %1380 = vmatprep.subr.bf16.mxu0 0
      %1381 = vmatpush1.bf16.msra.mxu0 %v1359
      %1382 = vmatprep.subr.bf16.mxu0 0
      %1383 = vmatpush1.bf16.msra.mxu0 %v1360
      %1384 = vmatprep.subr.bf16.mxu0 0
      %1385 = vmatpush1.bf16.msra.mxu0 %v1361
      %1386 = vmatprep.subr.bf16.mxu0 0
      %1387 = vmatpush1.bf16.msra.mxu0 0
      %1388 = vmatprep.subr.bf16.mxu0 0
      %1389 = vmatpush1.bf16.msra.mxu0 0
      %1390 = vmatprep.subr.bf16.mxu0 0
      %1391 = vmatpush1.bf16.msra.mxu0 0
      %1392 = vmatprep.subr.bf16.mxu0 0
      %1393 = vmatpush1.bf16.msra.mxu0 0
      %1394 = vmatprep.subr.bf16.mxu0 0
      %1395 = vmatpush1.bf16.msra.mxu0 0
      %1396 = vmatprep.subr.bf16.mxu0 0
      %1397 = vmatpush1.bf16.msra.mxu0 0
      %1398 = vmatprep.subr.bf16.mxu0 0
      %1399 = vmatpush1.bf16.msra.mxu0 0
      %1400 = vmatprep.subr.bf16.mxu0 0
      %1401 = vmatpush1.bf16.msra.mxu0 0
      %1402 = vmatprep.mubr.bf16.mxu0 0
      %1403 = vmatmul.mubr.bf16.gmra.mrb[0].mxu0 %v1292
      %v1404 = vpop.f32.mrb[0].mxu0
      %v1405 = vadd.f32 %v1321, %v1404
      %v1406 = vpop.f32.mrb[0].mxu0
      %v1407 = vpop.f32.mrb[0].mxu0
      %v1408 = vadd.f32 %v1321, %v1407
      %v1409 = vpop.f32.mrb[0].mxu0
      %1410 = vmatprep.mubr.bf16.mxu0 0
      %1411 = vmatmul.mubr.bf16.gmra.mrb[0].mxu0 %v1293
      %v1412 = vpop.f32.mrb[0].mxu0
      %v1413 = vadd.f32 %v1321, %v1412
      %v1414 = vpop.f32.mrb[0].mxu0
      %v1415 = vpop.f32.mrb[0].mxu0
      %v1416 = vadd.f32 %v1321, %v1415
      %v1417 = vpop.f32.mrb[0].mxu0
      %1418 = vmatprep.mubr.bf16.mxu0 0
      %1419 = vmatmul.mubr.bf16.gmra.mrb[0].mxu0 %v1294
      %v1420 = vpop.f32.mrb[0].mxu0
      %v1421 = vadd.f32 %v1321, %v1420
      %v1422 = vpop.f32.mrb[0].mxu0
      %v1423 = vpop.f32.mrb[0].mxu0
      %v1424 = vadd.f32 %v1321, %v1423
      %v1425 = vpop.f32.mrb[0].mxu0
      %1426 = vmatprep.mubr.bf16.mxu0 0
      %1427 = vmatmul.mubr.bf16.gmra.mrb[0].mxu0 %v1295
      %v1428 = vpop.f32.mrb[0].mxu0
      %v1429 = vadd.f32 %v1321, %v1428
      %v1430 = vpop.f32.mrb[0].mxu0
      %v1431 = vpop.f32.mrb[0].mxu0
      %v1432 = vadd.f32 %v1321, %v1431
      %v1433 = vpop.f32.mrb[0].mxu0
      %1434 = vmatprep.mubr.bf16.mxu0 0
      %1435 = vmatmul.mubr.bf16.gmra.mrb[0].mxu0 %v1296
      %v1436 = vpop.f32.mrb[0].mxu0
      %v1437 = vadd.f32 %v1321, %v1436
      %v1438 = vpop.f32.mrb[0].mxu0
      %v1439 = vpop.f32.mrb[0].mxu0
      %v1440 = vadd.f32 %v1321, %v1439
      %v1441 = vpop.f32.mrb[0].mxu0
      %1442 = vmatprep.mubr.bf16.mxu0 0
      %1443 = vmatmul.mubr.bf16.gmra.mrb[0].mxu0 %v1297
      %v1444 = vpop.f32.mrb[0].mxu0
      %v1445 = vadd.f32 %v1321, %v1444
      %v1446 = vpop.f32.mrb[0].mxu0
      %v1447 = vpop.f32.mrb[0].mxu0
      %v1448 = vadd.f32 %v1321, %v1447
      %v1449 = vpop.f32.mrb[0].mxu0
      %1450 = vmatprep.mubr.bf16.mxu0 0
      %1451 = vmatmul.mubr.bf16.gmra.mrb[0].mxu0 %v1298
      %v1452 = vpop.f32.mrb[0].mxu0
      %v1453 = vadd.f32 %v1321, %v1452
      %v1454 = vpop.f32.mrb[0].mxu0
      %v1455 = vpop.f32.mrb[0].mxu0
      %v1456 = vadd.f32 %v1321, %v1455
      %v1457 = vpop.f32.mrb[0].mxu0
      %1458 = vmatprep.mubr.bf16.mxu0 0
      %1459 = vmatmul.mubr.bf16.gmra.mrb[0].mxu0 %v1299
      %v1460 = vpop.f32.mrb[0].mxu0
      %v1461 = vadd.f32 %v1321, %v1460
      %v1462 = vpop.f32.mrb[0].mxu0
      %v1463 = vpop.f32.mrb[0].mxu0
      %v1464 = vadd.f32 %v1321, %v1463
      %v1465 = vpop.f32.mrb[0].mxu0
      %1466 = vdwg.mxu0
      %v1467 = vxor.u32 %v1405, 2147483648
      %v1468 = vxor.u32 %v1408, 2147483648
      %v1469 = vxor.u32 %v1413, 2147483648
      %v1470 = vxor.u32 %v1416, 2147483648
      %v1471 = vxor.u32 %v1421, 2147483648
      %v1472 = vxor.u32 %v1424, 2147483648
      %v1473 = vxor.u32 %v1429, 2147483648
      %v1474 = vxor.u32 %v1432, 2147483648
      %v1475 = vxor.u32 %v1437, 2147483648
      %v1476 = vxor.u32 %v1440, 2147483648
      %v1477 = vxor.u32 %v1445, 2147483648
      %v1478 = vxor.u32 %v1448, 2147483648
      %v1479 = vxor.u32 %v1453, 2147483648
      %v1480 = vxor.u32 %v1456, 2147483648
      %v1481 = vxor.u32 %v1461, 2147483648
      %v1482 = vxor.u32 %v1464, 2147483648
      %v1483 = vmul.f32 %v1467, 1.442695
      %v1484 = vpow.pop %v1483
      %v1485 = vmul.f32 %v1468, 1.442695
      %v1486 = vpow.pop %v1485
      %v1487 = vmul.f32 %v1469, 1.442695
      %v1488 = vpow.pop %v1487
      %v1489 = vmul.f32 %v1470, 1.442695
      %v1490 = vpow.pop %v1489
      %v1491 = vmul.f32 %v1471, 1.442695
      %v1492 = vpow.pop %v1491
      %v1493 = vmul.f32 %v1472, 1.442695
      %v1494 = vpow.pop %v1493
      %v1495 = vmul.f32 %v1473, 1.442695
      %v1496 = vpow.pop %v1495
      %v1497 = vmul.f32 %v1474, 1.442695
      %v1498 = vpow.pop %v1497
      %v1499 = vmul.f32 %v1475, 1.442695
      %v1500 = vpow.pop %v1499
      %v1501 = vmul.f32 %v1476, 1.442695
      %v1502 = vpow.pop %v1501
      %v1503 = vmul.f32 %v1477, 1.442695
      %v1504 = vpow.pop %v1503
      %v1505 = vmul.f32 %v1478, 1.442695
      %v1506 = vpow.pop %v1505
      %v1507 = vmul.f32 %v1479, 1.442695
      %v1508 = vpow.pop %v1507
      %v1509 = vmul.f32 %v1480, 1.442695
      %v1510 = vpow.pop %v1509
      %v1511 = vmul.f32 %v1481, 1.442695
      %v1512 = vpow.pop %v1511
      %v1513 = vmul.f32 %v1482, 1.442695
      %v1514 = vpow.pop %v1513
      %v1515 = vadd.f32 %v1484, 1.0
      %v1516 = vadd.f32 %v1486, 1.0
      %v1517 = vadd.f32 %v1488, 1.0
      %v1518 = vadd.f32 %v1490, 1.0
      %v1519 = vadd.f32 %v1492, 1.0
      %v1520 = vadd.f32 %v1494, 1.0
      %v1521 = vadd.f32 %v1496, 1.0
      %v1522 = vadd.f32 %v1498, 1.0
      %v1523 = vadd.f32 %v1500, 1.0
      %v1524 = vadd.f32 %v1502, 1.0
      %v1525 = vadd.f32 %v1504, 1.0
      %v1526 = vadd.f32 %v1506, 1.0
      %v1527 = vadd.f32 %v1508, 1.0
      %v1528 = vadd.f32 %v1510, 1.0
      %v1529 = vadd.f32 %v1512, 1.0
      %v1530 = vadd.f32 %v1514, 1.0
      %v1531 = vrcp.pop %v1515
      %v1532 = vmul.f32 1.0, %v1531
      %v1533 = vrcp.pop %v1516
      %v1534 = vmul.f32 1.0, %v1533
      %v1535 = vrcp.pop %v1517
      %v1536 = vmul.f32 1.0, %v1535
      %v1537 = vrcp.pop %v1518
      %v1538 = vmul.f32 1.0, %v1537
      %v1539 = vrcp.pop %v1519
      %v1540 = vmul.f32 1.0, %v1539
      %v1541 = vrcp.pop %v1520
      %v1542 = vmul.f32 1.0, %v1541
      %v1543 = vrcp.pop %v1521
      %v1544 = vmul.f32 1.0, %v1543
      %v1545 = vrcp.pop %v1522
      %v1546 = vmul.f32 1.0, %v1545
      %v1547 = vrcp.pop %v1523
      %v1548 = vmul.f32 1.0, %v1547
      %v1549 = vrcp.pop %v1524
      %v1550 = vmul.f32 1.0, %v1549
      %v1551 = vrcp.pop %v1525
      %v1552 = vmul.f32 1.0, %v1551
      %v1553 = vrcp.pop %v1526
      %v1554 = vmul.f32 1.0, %v1553
      %v1555 = vrcp.pop %v1527
      %v1556 = vmul.f32 1.0, %v1555
      %v1557 = vrcp.pop %v1528
      %v1558 = vmul.f32 1.0, %v1557
      %v1559 = vrcp.pop %v1529
      %v1560 = vmul.f32 1.0, %v1559
      %v1561 = vrcp.pop %v1530
      %v1562 = vmul.f32 1.0, %v1561
      %v1563 = vmul.f32 %v1405, %v1532
      %v1564 = vmul.f32 %v1408, %v1534
      %v1565 = vmul.f32 %v1413, %v1536
      %v1566 = vmul.f32 %v1416, %v1538
      %v1567 = vmul.f32 %v1421, %v1540
      %v1568 = vmul.f32 %v1424, %v1542
      %v1569 = vmul.f32 %v1429, %v1544
      %v1570 = vmul.f32 %v1432, %v1546
      %v1571 = vmul.f32 %v1437, %v1548
      %v1572 = vmul.f32 %v1440, %v1550
      %v1573 = vmul.f32 %v1445, %v1552
      %v1574 = vmul.f32 %v1448, %v1554
      %v1575 = vmul.f32 %v1453, %v1556
      %v1576 = vmul.f32 %v1456, %v1558
      %v1577 = vmul.f32 %v1461, %v1560
      %v1578 = vmul.f32 %v1464, %v1562
      %v1579 = vpack.c.bf16 %v1564, %v1563
      %v1580 = vpack.c.bf16 %v1566, %v1565
      %v1581 = vpack.c.bf16 %v1568, %v1567
      %v1582 = vpack.c.bf16 %v1570, %v1569
      %v1583 = vpack.c.bf16 %v1572, %v1571
      %v1584 = vpack.c.bf16 %v1574, %v1573
      %v1585 = vpack.c.bf16 %v1576, %v1575
      %v1586 = vpack.c.bf16 %v1578, %v1577
      %v1587 = vld [vmem:[#allocation10] sm:$0xf]
      %v1588 = vld [vmem:[#allocation10 + $0x4] sm:$0xf]
      %v1589 = vld [vmem:[#allocation10 + $0x8] sm:$0xf]
      %v1590 = vld [vmem:[#allocation10 + $0xc] sm:$0xf]
      %v1591 = vld [vmem:[#allocation10 + $0x10] sm:$0xf]
      %v1592 = vld [vmem:[#allocation10 + $0x14] sm:$0xf]
      %v1593 = vld [vmem:[#allocation10 + $0x18] sm:$0xf]
      %v1594 = vld [vmem:[#allocation10 + $0x1c] sm:$0xf]
      %v1595 = vld [vmem:[#allocation10 + $0x20] sm:$0xf]
      %v1596 = vld [vmem:[#allocation10 + $0x24] sm:$0xf]
      %v1597 = vld [vmem:[#allocation10 + $0x28] sm:$0xf]
      %v1598 = vld [vmem:[#allocation10 + $0x2c] sm:$0xf]
      %v1599 = vld [vmem:[#allocation10 + $0x30] sm:$0xf]
      %v1600 = vld [vmem:[#allocation10 + $0x34] sm:$0xf]
      %v1601 = vld [vmem:[#allocation10 + $0x38] sm:$0xf]
      %v1602 = vld [vmem:[#allocation10 + $0x3c] sm:$0xf]
      %v1619 = vunpack.c.l.b16 %v1587
      %v1620 = vunpack.c.l.b16 %v1588
      %v1621 = vunpack.c.l.b16 %v1589
      %v1622 = vunpack.c.l.b16 %v1590
      %v1623 = vunpack.c.l.b16 %v1591
      %v1624 = vunpack.c.l.b16 %v1592
      %v1625 = vunpack.c.l.b16 %v1593
      %v1626 = vunpack.c.l.b16 %v1594
      %v1627 = vunpack.c.l.b16 %v1595
      %v1628 = vunpack.c.l.b16 %v1596
      %v1629 = vunpack.c.l.b16 %v1597
      %v1630 = vunpack.c.l.b16 %v1598
      %v1631 = vunpack.c.l.b16 %v1599
      %v1632 = vunpack.c.l.b16 %v1600
      %v1633 = vunpack.c.l.b16 %v1601
      %v1634 = vunpack.c.l.b16 %v1602
      %v1635 = vpack.c.b16 %v1620, %v1619
      %v1636 = vpack.c.b16 %v1622, %v1621
      %v1637 = vpack.c.b16 %v1624, %v1623
      %v1638 = vpack.c.b16 %v1626, %v1625
      %v1639 = vpack.c.b16 %v1628, %v1627
      %v1640 = vpack.c.b16 %v1630, %v1629
      %v1641 = vpack.c.b16 %v1632, %v1631
      %v1642 = vpack.c.b16 %v1634, %v1633
      %1651 = vmatprep.subr.bf16.mxu0 0
      %1652 = vmatpush1.bf16.msra.mxu0 %v1635
      %1653 = vmatprep.subr.bf16.mxu0 0
      %1654 = vmatpush1.bf16.msra.mxu0 %v1636
      %1655 = vmatprep.subr.bf16.mxu0 0
      %1656 = vmatpush1.bf16.msra.mxu0 %v1637
      %1657 = vmatprep.subr.bf16.mxu0 0
      %1658 = vmatpush1.bf16.msra.mxu0 %v1638
      %1659 = vmatprep.subr.bf16.mxu0 0
      %1660 = vmatpush1.bf16.msra.mxu0 %v1639
      %1661 = vmatprep.subr.bf16.mxu0 0
      %1662 = vmatpush1.bf16.msra.mxu0 %v1640
      %1663 = vmatprep.subr.bf16.mxu0 0
      %1664 = vmatpush1.bf16.msra.mxu0 %v1641
      %1665 = vmatprep.subr.bf16.mxu0 0
      %1666 = vmatpush1.bf16.msra.mxu0 %v1642
      %1667 = vmatprep.subr.bf16.mxu0 0
      %1668 = vmatpush1.bf16.msra.mxu0 0
      %1669 = vmatprep.subr.bf16.mxu0 0
      %1670 = vmatpush1.bf16.msra.mxu0 0
      %1671 = vmatprep.subr.bf16.mxu0 0
      %1672 = vmatpush1.bf16.msra.mxu0 0
      %1673 = vmatprep.subr.bf16.mxu0 0
      %1674 = vmatpush1.bf16.msra.mxu0 0
      %1675 = vmatprep.subr.bf16.mxu0 0
      %1676 = vmatpush1.bf16.msra.mxu0 0
      %1677 = vmatprep.subr.bf16.mxu0 0
      %1678 = vmatpush1.bf16.msra.mxu0 0
      %1679 = vmatprep.subr.bf16.mxu0 0
      %1680 = vmatpush1.bf16.msra.mxu0 0
      %1681 = vmatprep.subr.bf16.mxu0 0
      %1682 = vmatpush1.bf16.msra.mxu0 0
      %1683 = vmatprep.mubr.bf16.mxu0 0
      %1684 = vmatmul.mubr.bf16.gmra.mrb[0].mxu0 %v1579
      %v1685 = vpop.f32.mrb[0].mxu0
      %v1686 = vadd.f32 0.0, %v1685
      %v1687 = vpop.f32.mrb[0].mxu0
      %v1688 = vpop.f32.mrb[0].mxu0
      %v1689 = vadd.f32 0.0, %v1688
      %v1690 = vpop.f32.mrb[0].mxu0
      %1691 = vmatprep.mubr.bf16.mxu0 0
      %1692 = vmatmul.mubr.bf16.gmra.mrb[0].mxu0 %v1580
      %v1693 = vpop.f32.mrb[0].mxu0
      %v1694 = vadd.f32 0.0, %v1693
      %v1695 = vpop.f32.mrb[0].mxu0
      %v1696 = vpop.f32.mrb[0].mxu0
      %v1697 = vadd.f32 0.0, %v1696
      %v1698 = vpop.f32.mrb[0].mxu0
      %1699 = vmatprep.mubr.bf16.mxu0 0
      %1700 = vmatmul.mubr.bf16.gmra.mrb[0].mxu0 %v1581
      %v1701 = vpop.f32.mrb[0].mxu0
      %v1702 = vadd.f32 0.0, %v1701
      %v1703 = vpop.f32.mrb[0].mxu0
      %v1704 = vpop.f32.mrb[0].mxu0
      %v1705 = vadd.f32 0.0, %v1704
      %v1706 = vpop.f32.mrb[0].mxu0
      %1707 = vmatprep.mubr.bf16.mxu0 0
      %1708 = vmatmul.mubr.bf16.gmra.mrb[0].mxu0 %v1582
      %v1709 = vpop.f32.mrb[0].mxu0
      %v1710 = vadd.f32 0.0, %v1709
      %v1711 = vpop.f32.mrb[0].mxu0
      %v1712 = vpop.f32.mrb[0].mxu0
      %v1713 = vadd.f32 0.0, %v1712
      %v1714 = vpop.f32.mrb[0].mxu0
      %1715 = vmatprep.mubr.bf16.mxu0 0
      %1716 = vmatmul.mubr.bf16.gmra.mrb[0].mxu0 %v1583
      %v1717 = vpop.f32.mrb[0].mxu0
      %v1718 = vadd.f32 0.0, %v1717
      %v1719 = vpop.f32.mrb[0].mxu0
      %v1720 = vpop.f32.mrb[0].mxu0
      %v1721 = vadd.f32 0.0, %v1720
      %v1722 = vpop.f32.mrb[0].mxu0
      %1723 = vmatprep.mubr.bf16.mxu0 0
      %1724 = vmatmul.mubr.bf16.gmra.mrb[0].mxu0 %v1584
      %v1725 = vpop.f32.mrb[0].mxu0
      %v1726 = vadd.f32 0.0, %v1725
      %v1727 = vpop.f32.mrb[0].mxu0
      %v1728 = vpop.f32.mrb[0].mxu0
      %v1729 = vadd.f32 0.0, %v1728
      %v1730 = vpop.f32.mrb[0].mxu0
      %1731 = vmatprep.mubr.bf16.mxu0 0
      %1732 = vmatmul.mubr.bf16.gmra.mrb[0].mxu0 %v1585
      %v1733 = vpop.f32.mrb[0].mxu0
      %v1734 = vadd.f32 0.0, %v1733
      %v1735 = vpop.f32.mrb[0].mxu0
      %v1736 = vpop.f32.mrb[0].mxu0
      %v1737 = vadd.f32 0.0, %v1736
      %v1738 = vpop.f32.mrb[0].mxu0
      %1739 = vmatprep.mubr.bf16.mxu0 0
      %1740 = vmatmul.mubr.bf16.gmra.mrb[0].mxu0 %v1586
      %v1741 = vpop.f32.mrb[0].mxu0
      %v1742 = vadd.f32 0.0, %v1741
      %v1743 = vpop.f32.mrb[0].mxu0
      %v1744 = vpop.f32.mrb[0].mxu0
      %v1745 = vadd.f32 0.0, %v1744
      %v1746 = vpop.f32.mrb[0].mxu0
      %1747 = vdwg.mxu0
      %v1748 = vld [vmem:[%s5] sm:$0x1]
      %v1749 = vlaneseq
      %v1750 = vshrl.u32 %v1749, 7
      %v1751 = vlaneseq
      %v1752 = vshrl.u32 %v1751, 7
      %v1753 = vsub.s32 0, %v1752
      %v1754 = vrot.slane %v1748, %v1753
      %vm1755 = vcmp.eq.s32.totalorder %v1750, %v1754
      %v1756 = vsel %vm1755, 1, 0
      %v1757 = vcvt.s32.f32 %v1756
      %v1758 = vpack.c.bf16 %v1757, %v1757
      %v1759 = vld [vmem:[#allocation3] sm:$0x3]
      %v1760 = vpack.c.bf16 %v1689, %v1686
      %v1761 = vpack.c.bf16 %v1697, %v1694
      %v1762 = vpack.c.bf16 %v1705, %v1702
      %v1763 = vpack.c.bf16 %v1713, %v1710
      %v1764 = vpack.c.bf16 %v1721, %v1718
      %v1765 = vpack.c.bf16 %v1729, %v1726
      %v1766 = vpack.c.bf16 %v1737, %v1734
      %v1767 = vpack.c.bf16 %v1745, %v1742
      %1768 = vmatprep.subr.bf16.mxu0 0
      %1769 = vmatpush1.bf16.msra.mxu0 %v1760
      %1770 = vmatprep.subr.bf16.mxu0 0
      %1771 = vmatpush1.bf16.msra.mxu0 %v1761
      %1772 = vmatprep.subr.bf16.mxu0 0
      %1773 = vmatpush1.bf16.msra.mxu0 %v1762
      %1774 = vmatprep.subr.bf16.mxu0 0
      %1775 = vmatpush1.bf16.msra.mxu0 %v1763
      %1776 = vmatprep.subr.bf16.mxu0 0
      %1777 = vmatpush1.bf16.msra.mxu0 %v1764
      %1778 = vmatprep.subr.bf16.mxu0 0
      %1779 = vmatpush1.bf16.msra.mxu0 %v1765
      %1780 = vmatprep.subr.bf16.mxu0 0
      %1781 = vmatpush1.bf16.msra.mxu0 %v1766
      %1782 = vmatprep.subr.bf16.mxu0 0
      %1783 = vmatpush1.bf16.msra.mxu0 %v1767
      %1784 = vmatprep.subr.bf16.mxu0 0
      %1785 = vmatpush1.bf16.msra.mxu0 0
      %1786 = vmatprep.subr.bf16.mxu0 0
      %1787 = vmatpush1.bf16.msra.mxu0 0
      %1788 = vmatprep.subr.bf16.mxu0 0
      %1789 = vmatpush1.bf16.msra.mxu0 0
      %1790 = vmatprep.subr.bf16.mxu0 0
      %1791 = vmatpush1.bf16.msra.mxu0 0
      %1792 = vmatprep.subr.bf16.mxu0 0
      %1793 = vmatpush1.bf16.msra.mxu0 0
      %1794 = vmatprep.subr.bf16.mxu0 0
      %1795 = vmatpush1.bf16.msra.mxu0 0
      %1796 = vmatprep.subr.bf16.mxu0 0
      %1797 = vmatpush1.bf16.msra.mxu0 0
      %1798 = vmatprep.subr.bf16.mxu0 0
      %1799 = vmatpush1.bf16.msra.mxu0 0
      %1800 = vmatprep.mubr.bf16.mxu0 0
      %1801 = vmatmul.mubr.bf16.gmra.mrb[0].mxu0 %v1758
      %v1802 = vpop.f32.mrb[0].mxu0
      %v1803 = vadd.f32 0.0, %v1802
      %v1804 = vpop.f32.mrb[0].mxu0
      %v1805 = vpop.f32.mrb[0].mxu0
      %v1806 = vpop.f32.mrb[0].mxu0
      %1807 = vdwg.mxu0
      %v1808 = vadd.f32 %v1759, %v1803
      %1809 = vst [vmem:[#allocation3] sm:$0x3] %v1808
      %v1810 = vld [vmem:[#allocation3] sm:$0x3]
      %1811 = vst [vmem:[#allocation12] sm:$0x3] %v1810
    $region57: #{tpu_custom_call.1} parent=1 // pred_fallthru
      _
    // Predicated region
    $region58: #{tpu_custom_call.1} parent=1 // pred_check
      _
    $region59: #{tpu_custom_call.1} parent=1 // pred_check_branch
      %1813 = sbr.rel (0) target = $region61
    $region60: #{tpu_custom_call.1} parent=1 // pred_region
      %s1815 = ssub.s32 32, 32
      %1816 = vsyncadd [#allocation9], %s1815
      %s1818 = sshll.u32 [#allocation12], 4
      %s1819 = int_to_ptr.vmem [resolvable:$true] %s1818
      %1821 = dma.vmem_to_hbm [thread:$0]  %s1819, 32, %s10, [#allocation9]
    $region61: #{tpu_custom_call.1} parent=1 // pred_fallthru
      _
    // Predicated region
    $region62: #{tpu_custom_call.1} parent=1 // pred_check
      _
    $region63: #{tpu_custom_call.1} parent=1 // pred_check_branch
      %1823 = sbr.rel (0) target = $region65
    $region64: #{tpu_custom_call.1} parent=1 // pred_region
      %1824 = dma.done [#allocation9], 32
    $region65: #{tpu_custom_call.1} parent=1 // pred_fallthru
      _
    %1825 = vsyncpa [#allocation8], 1
    %1826 = vsyncpa [#allocation11], 1
    %1827 = vsyncpa [#allocation9], 1

</llo_original>
